<compile_context>
chip_gen: v7x
topology: tpu7x:2x2x1
jax: 0.10.0
libtpu: 0.0.40
codegen_flags: <defaults>
</compile_context>

<pallas_src>
import functools

import jax
import jax.numpy as jnp
from jax.experimental import pallas as pl
from jax.experimental.pallas import tpu as pltpu

HP = 128   # padded hidden / feature lane width
FP = 128   # padded input-node-feature lane width
OP = 128   # padded output lane width


def _vmem_specs(n):
    return [pl.BlockSpec(memory_space=pltpu.MemorySpace.VMEM) for _ in range(n)]


# ----------------------------------------------------------------------------
# Fused Pallas kernel: embedder -> L x MPNN layer -> add-pool -> head
# ----------------------------------------------------------------------------
def mpnn_fused_kernel(
    x_ref, ea_ref, gather_col_ref, dst_row_ref, batch_row_ref,
    emb_w1_ref, emb_b1_ref, emb_w2_ref, emb_b2_ref,
    msg_w1_ref, msg_b1_ref, msg_w2_ref, msg_b2_ref,
    upd_w1_ref, upd_b1_ref, upd_w2_ref, upd_b2_ref,
    head_w1_ref, head_b1_ref, head_w2_ref, head_b2_ref,
    out_ref,
    *, hidden,
):
    f32 = jnp.float32
    bf16 = jnp.bfloat16
    N = x_ref.shape[0]
    E = ea_ref.shape[0]
    E2 = gather_col_ref.shape[0]          # == 2 * E
    BP = out_ref.shape[0]
    L = msg_w1_ref.shape[0]

    def dot(a, b):
        # bf16 MXU operands (native on v5e/v6e/v7x), f32 accumulate.
        return jnp.dot(a.astype(bf16), b.astype(bf16), preferred_element_type=f32)

    # One-hot gather / scatter / pool matrices — exact 0/1 values, so bf16 is lossless.
    # Built once from small int32 index vectors and reused across all layers.
    iota_2en = jax.lax.broadcasted_iota(jnp.int32, (E2, N), 1)
    g_both = (gather_col_ref[...] == iota_2en).astype(bf16)   # [2E,N]: rows 0..E-1 -> dst, E..2E-1 -> src
    iota_ne = jax.lax.broadcasted_iota(jnp.int32, (N, E), 0)
    scat = (iota_ne == dst_row_ref[...]).astype(bf16)         # [N, E]: scatter-add msgs to dst
    iota_bn = jax.lax.broadcasted_iota(jnp.int32, (BP, N), 0)
    pool = (iota_bn == batch_row_ref[...]).astype(bf16)       # [BP, N]: global_add_pool

    # Embedder: Linear -> ReLU -> Linear.  Lanes >= hidden stay exactly zero.
    h = jnp.maximum(dot(x_ref[...], emb_w1_ref[...]) + emb_b1_ref[...], 0.0)
    h = dot(h, emb_w2_ref[...]) + emb_b2_ref[...]             # [N, HP]

    ea = ea_ref[...]                                          # edge_attr pre-placed at lanes 2H..2H+Fe-1
    for l in range(L):                                        # static unroll (L=2)
        # Fused per-edge gather: one MXU push of h for both x_i and x_j.
        xij = dot(g_both, h)                                  # [2E, HP]
        x_i = xij[:E, :]                                      # target-node features per edge
        x_j = xij[E:, :]                                      # source-node features per edge
        # Lane-packed concat([x_i, x_j, edge_attr]) -> single 128-lane block (K=128).
        m_in = x_i + pltpu.roll(x_j, shift=hidden, axis=1) + ea
        mh = jnp.maximum(dot(m_in, msg_w1_ref[l]) + msg_b1_ref[l], 0.0)
        msg = dot(mh, msg_w2_ref[l]) + msg_b2_ref[l]          # [E, HP]
        # aggr='add'
        agg = dot(scat, msg)                                  # [N, HP]
        # Lane-packed concat([x, agg]) -> single 128-lane block (K=128).
        u_in = h + pltpu.roll(agg, shift=hidden, axis=1)
        uh = jnp.maximum(dot(u_in, upd_w1_ref[l]) + upd_b1_ref[l], 0.0)
        h = dot(uh, upd_w2_ref[l]) + upd_b2_ref[l]            # [N, HP]

    # pool='add' + head
    pooled = dot(pool, h)                                     # [BP, HP]
    hh = jnp.maximum(dot(pooled, head_w1_ref[...]) + head_b1_ref[...], 0.0)
    out_ref[...] = dot(hh, head_w2_ref[...]) + head_b2_ref[...]   # [BP, OP] lane-dense store


# ----------------------------------------------------------------------------
# Parameter init (PyTorch-Linear style) and one-time padding / packing
# ----------------------------------------------------------------------------
def init_linear(key, fan_in, fan_out):
    kw, kb = jax.random.split(key)
    bound = 1.0 / jnp.sqrt(fan_in)
    w = jax.random.uniform(kw, (fan_in, fan_out), jnp.float32, -bound, bound)
    b = jax.random.uniform(kb, (1, fan_out), jnp.float32, -bound, bound)
    return w, b


def init_params(key, node_features, edge_features, hidden, out_features, num_layers):
    keys = jax.random.split(key, 4 + 4 * num_layers)
    p = {}
    p["emb_w1"], p["emb_b1"] = init_linear(keys[0], node_features, hidden)
    p["emb_w2"], p["emb_b2"] = init_linear(keys[1], hidden, hidden)
    p["layers"] = []
    for l in range(num_layers):
        k = keys[2 + 4 * l: 6 + 4 * l]
        lp = {}
        lp["msg_w1"], lp["msg_b1"] = init_linear(k[0], 2 * hidden + edge_features, hidden)
        lp["msg_w2"], lp["msg_b2"] = init_linear(k[1], hidden, hidden)
        lp["upd_w1"], lp["upd_b1"] = init_linear(k[2], hidden + hidden, hidden)
        lp["upd_w2"], lp["upd_b2"] = init_linear(k[3], hidden, hidden)
        p["layers"].append(lp)
    p["head_w1"], p["head_b1"] = init_linear(keys[-2], hidden, hidden)
    p["head_w2"], p["head_b2"] = init_linear(keys[-1], hidden, out_features)
    return p


def _pad2(w, rows, cols, dtype=jnp.float32):
    out = jnp.zeros((rows, cols), jnp.float32).at[: w.shape[0], : w.shape[1]].set(w)
    return out.astype(dtype)


def pack_params(params, edge_features, hidden):
    """Pad all weights to lane-dense (128) shapes, repack the concat-split first-layer
    weights into a SINGLE 128-row K block (lane-packed inputs), and cast matmul weights
    to bf16.  Done ONCE, outside the per-forward path.  Biases stay f32 (VPU adds)."""
    H, Fe = hidden, edge_features
    assert 2 * H + Fe <= HP, "lane-packing requires 2*hidden + edge_features <= 128"
    bf16 = jnp.bfloat16
    packed = {
        "emb_w1": _pad2(params["emb_w1"], FP, HP, bf16),
        "emb_b1": _pad2(params["emb_b1"], 1, HP),
        "emb_w2": _pad2(params["emb_w2"], HP, HP, bf16),
        "emb_b2": _pad2(params["emb_b2"], 1, HP),
        "head_w1": _pad2(params["head_w1"], HP, HP, bf16),
        "head_b1": _pad2(params["head_b1"], 1, HP),
        "head_w2": _pad2(params["head_w2"], HP, OP, bf16),
        "head_b2": _pad2(params["head_b2"], 1, OP),
    }
    mw1s, mb1s, mw2s, mb2s = [], [], [], []
    uw1s, ub1s, uw2s, ub2s = [], [], [], []
    for lp in params["layers"]:
        # message-net first layer: inputs lane-packed as [x_i | x_j | edge_attr] in 128 lanes
        w1m = lp["msg_w1"]                                       # [2H + Fe, H]
        mw1 = jnp.zeros((HP, HP), jnp.float32)
        mw1 = mw1.at[0:H, :H].set(w1m[0:H])                      # x_i rows (lanes 0..H-1)
        mw1 = mw1.at[H:2 * H, :H].set(w1m[H:2 * H])              # x_j rows (lanes H..2H-1)
        mw1 = mw1.at[2 * H:2 * H + Fe, :H].set(w1m[2 * H:])      # edge_attr rows (lanes 2H..)
        mw1s.append(mw1.astype(bf16))
        mb1s.append(_pad2(lp["msg_b1"], 1, HP))
        mw2s.append(_pad2(lp["msg_w2"], HP, HP, bf16))
        mb2s.append(_pad2(lp["msg_b2"], 1, HP))
        # update-net first layer: inputs lane-packed as [x | agg] in 128 lanes
        w1u = lp["upd_w1"]                                       # [2H, H]
        uw1 = jnp.zeros((HP, HP), jnp.float32)
        uw1 = uw1.at[0:H, :H].set(w1u[0:H])                      # x rows (lanes 0..H-1)
        uw1 = uw1.at[H:2 * H, :H].set(w1u[H:2 * H])              # agg rows (lanes H..2H-1)
        uw1s.append(uw1.astype(bf16))
        ub1s.append(_pad2(lp["upd_b1"], 1, HP))
        uw2s.append(_pad2(lp["upd_w2"], HP, HP, bf16))
        ub2s.append(_pad2(lp["upd_b2"], 1, HP))
    packed["msg_w1"] = jnp.stack(mw1s)
    packed["msg_b1"] = jnp.stack(mb1s)
    packed["msg_w2"] = jnp.stack(mw2s)
    packed["msg_b2"] = jnp.stack(mb2s)
    packed["upd_w1"] = jnp.stack(uw1s)
    packed["upd_b1"] = jnp.stack(ub1s)
    packed["upd_w2"] = jnp.stack(uw2s)
    packed["upd_b2"] = jnp.stack(ub2s)
    return packed


# ----------------------------------------------------------------------------
# Forward wrappers
# ----------------------------------------------------------------------------
@functools.partial(jax.jit, static_argnames=("num_graphs", "out_features", "hidden",
                                              "edge_features"))
def mpnn_forward(packed, x, edge_index, batch, edge_attr,
                 num_graphs, out_features, hidden, edge_features):
    N = x.shape[0]
    E = edge_attr.shape[0]
    BP = max(8, ((num_graphs + 7) // 8) * 8)       # sublane-padded graph count
    # NOTE: if N / E ever need padding to multiples of 8, set the padded src/dst/batch
    # index entries to -1 so their one-hot rows/columns are all-zero.

    # lane-pad inputs; edge_attr goes straight to its packed lane slot (2H .. 2H+Fe-1)
    x_p = jnp.zeros((N, FP), jnp.float32).at[:, : x.shape[1]].set(x)
    ea_p = jnp.zeros((E, HP), jnp.float32).at[
        :, 2 * hidden: 2 * hidden + edge_features].set(edge_attr)

    src = edge_index[0].astype(jnp.int32)
    dst = edge_index[1].astype(jnp.int32)
    gather_col = jnp.concatenate([dst, src])[:, None]   # [2E,1]: rows 0..E-1 = x_i(dst), E.. = x_j(src)
    dst_row = dst[None, :]                              # [1, E]
    batch_row = batch.astype(jnp.int32)[None, :]        # [1, N]

    args = (
        x_p, ea_p, gather_col, dst_row, batch_row,
        packed["emb_w1"], packed["emb_b1"], packed["emb_w2"], packed["emb_b2"],
        packed["msg_w1"], packed["msg_b1"], packed["msg_w2"], packed["msg_b2"],
        packed["upd_w1"], packed["upd_b1"], packed["upd_w2"], packed["upd_b2"],
        packed["head_w1"], packed["head_b1"], packed["head_w2"], packed["head_b2"],
    )

    L = packed["msg_w1"].shape[0]
    flops = 2 * (
        N * FP * HP + N * HP * HP
        + L * ((2 * E) * N * HP          # fused gather
               + E * HP * HP + E * HP * HP   # message net (K=128 after lane-packing)
               + N * E * HP                  # scatter-add
               + N * HP * HP + N * HP * HP)  # update net (K=128 after lane-packing)
        + BP * N * HP + BP * HP * HP + BP * HP * OP
    )
    bytes_accessed = int(sum(int(a.size) * a.dtype.itemsize for a in args) + BP * OP * 4)

    kernel = functools.partial(mpnn_fused_kernel, hidden=hidden)
    out_pad = pl.pallas_call(
        kernel,
        out_shape=jax.ShapeDtypeStruct((BP, OP), jnp.float32),
        in_specs=_vmem_specs(len(args)),
        out_specs=pl.BlockSpec(memory_space=pltpu.MemorySpace.VMEM),
        compiler_params=pltpu.CompilerParams(vmem_limit_bytes=4 * 1024 * 1024),
        cost_estimate=pl.CostEstimate(flops=flops, transcendentals=0,
                                      bytes_accessed=bytes_accessed),
    )(*args)
    # Padded pool rows (graphs >= num_graphs) hold bias-only garbage; keep this slice.
    return out_pad[:num_graphs, :out_features]


def mpnn_forward_ref(params, x, edge_index, batch, edge_attr, num_graphs):
    """Pure-JAX f32 reference with the original (unpadded) parameters."""
    def mlp(z, w1, b1, w2, b2):
        return jnp.maximum(z @ w1 + b1, 0.0) @ w2 + b2

    src, dst = edge_index[0], edge_index[1]
    N, H = x.shape[0], params["emb_w2"].shape[1]
    h = mlp(x, params["emb_w1"], params["emb_b1"], params["emb_w2"], params["emb_b2"])
    for lp in params["layers"]:
        m_in = jnp.concatenate([h[dst], h[src], edge_attr], axis=-1)
        m = mlp(m_in, lp["msg_w1"], lp["msg_b1"], lp["msg_w2"], lp["msg_b2"])
        agg = jnp.zeros((N, H), jnp.float32).at[dst].add(m)
        u_in = jnp.concatenate([h, agg], axis=-1)
        h = mlp(u_in, lp["upd_w1"], lp["upd_b1"], lp["upd_w2"], lp["upd_b2"])
    pooled = jnp.zeros((num_graphs, H), jnp.float32).at[batch].add(h)
    return mlp(pooled, params["head_w1"], params["head_b1"],
               params["head_w2"], params["head_b2"])


# ----------------------------------------------------------------------------
if __name__ == "__main__":
    node_features, edge_features = 4, 4
    hidden_features, out_features = 32, 8
    num_layers = 2
    N, E_per_graph, B = 16, 16, 2   # 2 graphs of 8 nodes each, 32 edges total

    key = jax.random.PRNGKey(0)
    kx, ke, kedges, kparams = jax.random.split(key, 4)

    x = jax.random.normal(kx, (N, node_features), jnp.float32)
    edge_attr = jax.random.normal(ke, (2 * E_per_graph, edge_features), jnp.float32)

    # edges within each graph (graph 0 = nodes 0..7, graph 1 = nodes 8..15)
    k0, k1 = jax.random.split(kedges)
    e0 = jax.random.randint(k0, (2, E_per_graph), 0, N // 2)
    e1 = jax.random.randint(k1, (2, E_per_graph), 0, N // 2) + N // 2
    edge_index = jnp.concatenate([e0, e1], axis=1)  # [2, 32]

    batch = jnp.concatenate([jnp.zeros(N // 2, jnp.int32), jnp.ones(N // 2, jnp.int32)])

    params = init_params(kparams, node_features, edge_features,
                         hidden_features, out_features, num_layers)
    packed = pack_params(params, edge_features, hidden_features)   # one-time packing

    out = mpnn_forward(packed, x, edge_index, batch, edge_attr,
                       num_graphs=B, out_features=out_features,
                       hidden=hidden_features, edge_features=edge_features)
    out = jax.block_until_ready(out)

    ref = mpnn_forward_ref(params, x, edge_index, batch, edge_attr, B)
    assert out.shape == (B, out_features)
    # Tolerance loosened vs the pure-f32 version: MXU operands are bf16 (f32 accumulate).
    assert jnp.allclose(out, ref, rtol=5e-2, atol=5e-2), "Pallas output mismatch vs JAX reference"

    print("KERNEL_OK")
</pallas_src>

<mosaic_0001>
module attributes {stable_mosaic.version = 11 : i64} {
  func.func @mpnn_fused_kernel(%arg0: memref<16x128xf32, #tpu.memory_space<vmem>>, %arg1: memref<32x128xf32, #tpu.memory_space<vmem>>, %arg2: memref<64x1xi32, #tpu.memory_space<vmem>>, %arg3: memref<1x32xi32, #tpu.memory_space<vmem>>, %arg4: memref<1x16xi32, #tpu.memory_space<vmem>>, %arg5: memref<128x128xbf16, #tpu.memory_space<vmem>>, %arg6: memref<1x128xf32, #tpu.memory_space<vmem>>, %arg7: memref<128x128xbf16, #tpu.memory_space<vmem>>, %arg8: memref<1x128xf32, #tpu.memory_space<vmem>>, %arg9: memref<2x128x128xbf16, #tpu.memory_space<vmem>>, %arg10: memref<2x1x128xf32, #tpu.memory_space<vmem>>, %arg11: memref<2x128x128xbf16, #tpu.memory_space<vmem>>, %arg12: memref<2x1x128xf32, #tpu.memory_space<vmem>>, %arg13: memref<2x128x128xbf16, #tpu.memory_space<vmem>>, %arg14: memref<2x1x128xf32, #tpu.memory_space<vmem>>, %arg15: memref<2x128x128xbf16, #tpu.memory_space<vmem>>, %arg16: memref<2x1x128xf32, #tpu.memory_space<vmem>>, %arg17: memref<128x128xbf16, #tpu.memory_space<vmem>>, %arg18: memref<1x128xf32, #tpu.memory_space<vmem>>, %arg19: memref<128x128xbf16, #tpu.memory_space<vmem>>, %arg20: memref<1x128xf32, #tpu.memory_space<vmem>>, %arg21: memref<8x128xf32, #tpu.memory_space<vmem>>) attributes {dimension_semantics = [], scalar_prefetch = 0 : i64, scratch_operands = 0 : i64, tpu.core_type = #tpu.core_type<tc>} {
    %0 = tpu.iota {dimensions = array<i32: 1>} : vector<64x16xi32>
    %c0 = arith.constant 0 : index
    %c0_0 = arith.constant 0 : index
    %1 = vector.load %arg2[%c0, %c0_0] : memref<64x1xi32, #tpu.memory_space<vmem>>, vector<64x1xi32>
    %2 = vector.broadcast %1 : vector<64x1xi32> to vector<64x16xi32>
    %3 = arith.cmpi eq, %2, %0 : vector<64x16xi32>
    %4 = arith.extui %3 : vector<64x16xi1> to vector<64x16xi32>
    %5 = arith.sitofp %4 : vector<64x16xi32> to vector<64x16xf32>
    %6 = arith.truncf %5 : vector<64x16xf32> to vector<64x16xbf16>
    %7 = tpu.iota {dimensions = array<i32: 0>} : vector<16x32xi32>
    %c0_1 = arith.constant 0 : index
    %c0_2 = arith.constant 0 : index
    %8 = vector.load %arg3[%c0_1, %c0_2] : memref<1x32xi32, #tpu.memory_space<vmem>>, vector<1x32xi32>
    %9 = vector.broadcast %8 : vector<1x32xi32> to vector<16x32xi32>
    %10 = arith.cmpi eq, %7, %9 : vector<16x32xi32>
    %11 = arith.extui %10 : vector<16x32xi1> to vector<16x32xi32>
    %12 = arith.sitofp %11 : vector<16x32xi32> to vector<16x32xf32>
    %13 = arith.truncf %12 : vector<16x32xf32> to vector<16x32xbf16>
    %14 = tpu.iota {dimensions = array<i32: 0>} : vector<8x16xi32>
    %c0_3 = arith.constant 0 : index
    %c0_4 = arith.constant 0 : index
    %15 = vector.load %arg4[%c0_3, %c0_4] : memref<1x16xi32, #tpu.memory_space<vmem>>, vector<1x16xi32>
    %16 = vector.broadcast %15 : vector<1x16xi32> to vector<8x16xi32>
    %17 = arith.cmpi eq, %14, %16 : vector<8x16xi32>
    %18 = arith.extui %17 : vector<8x16xi1> to vector<8x16xi32>
    %19 = arith.sitofp %18 : vector<8x16xi32> to vector<8x16xf32>
    %20 = arith.truncf %19 : vector<8x16xf32> to vector<8x16xbf16>
    %c0_5 = arith.constant 0 : index
    %c0_6 = arith.constant 0 : index
    %21 = vector.load %arg0[%c0_5, %c0_6] : memref<16x128xf32, #tpu.memory_space<vmem>>, vector<16x128xf32>
    %c0_7 = arith.constant 0 : index
    %c0_8 = arith.constant 0 : index
    %22 = vector.load %arg5[%c0_7, %c0_8] : memref<128x128xbf16, #tpu.memory_space<vmem>>, vector<128x128xbf16>
    %23 = arith.truncf %21 : vector<16x128xf32> to vector<16x128xbf16>
    %cst = arith.constant dense<0.000000e+00> : vector<16x128xf32>
    %24 = tpu.matmul %23, %22, %cst {dimension_numbers = #tpu.dot_dimension_numbers<[1], [0], [0], [1], [0, 0, 1, 1], [], []>} : vector<16x128xbf16>, vector<128x128xbf16>, vector<16x128xf32> -> vector<16x128xf32>
    %c0_9 = arith.constant 0 : index
    %c0_10 = arith.constant 0 : index
    %25 = vector.load %arg6[%c0_9, %c0_10] : memref<1x128xf32, #tpu.memory_space<vmem>>, vector<1x128xf32>
    %26 = vector.broadcast %25 : vector<1x128xf32> to vector<16x128xf32>
    %27 = arith.addf %24, %26 : vector<16x128xf32>
    %cst_11 = arith.constant 0.000000e+00 : f32
    %28 = vector.broadcast %cst_11 : f32 to vector<16x128xf32>
    %29 = arith.maximumf %27, %28 : vector<16x128xf32>
    %c0_12 = arith.constant 0 : index
    %c0_13 = arith.constant 0 : index
    %30 = vector.load %arg7[%c0_12, %c0_13] : memref<128x128xbf16, #tpu.memory_space<vmem>>, vector<128x128xbf16>
    %31 = arith.truncf %29 : vector<16x128xf32> to vector<16x128xbf16>
    %cst_14 = arith.constant dense<0.000000e+00> : vector<16x128xf32>
    %32 = tpu.matmul %31, %30, %cst_14 {dimension_numbers = #tpu.dot_dimension_numbers<[1], [0], [0], [1], [0, 0, 1, 1], [], []>} : vector<16x128xbf16>, vector<128x128xbf16>, vector<16x128xf32> -> vector<16x128xf32>
    %c0_15 = arith.constant 0 : index
    %c0_16 = arith.constant 0 : index
    %33 = vector.load %arg8[%c0_15, %c0_16] : memref<1x128xf32, #tpu.memory_space<vmem>>, vector<1x128xf32>
    %34 = vector.broadcast %33 : vector<1x128xf32> to vector<16x128xf32>
    %35 = arith.addf %32, %34 : vector<16x128xf32>
    %c0_17 = arith.constant 0 : index
    %c0_18 = arith.constant 0 : index
    %36 = vector.load %arg1[%c0_17, %c0_18] : memref<32x128xf32, #tpu.memory_space<vmem>>, vector<32x128xf32>
    %37 = arith.truncf %35 : vector<16x128xf32> to vector<16x128xbf16>
    %cst_19 = arith.constant dense<0.000000e+00> : vector<64x128xf32>
    %38 = tpu.matmul %6, %37, %cst_19 {dimension_numbers = #tpu.dot_dimension_numbers<[1], [0], [0], [1], [0, 0, 1, 1], [], []>} : vector<64x16xbf16>, vector<16x128xbf16>, vector<64x128xf32> -> vector<64x128xf32>
    %39 = vector.extract_strided_slice %38 {offsets = [0, 0], sizes = [32, 128], strides = [1, 1]} : vector<64x128xf32> to vector<32x128xf32>
    %40 = vector.extract_strided_slice %38 {offsets = [32, 0], sizes = [32, 128], strides = [1, 1]} : vector<64x128xf32> to vector<32x128xf32>
    %c32_i32 = arith.constant 32 : i32
    %41 = tpu.dynamic_rotate %40 by %c32_i32 dim 1 : vector<32x128xf32>, i32 -> vector<32x128xf32>
    %42 = arith.addf %39, %41 : vector<32x128xf32>
    %43 = arith.addf %42, %36 : vector<32x128xf32>
    %c0_20 = arith.constant 0 : index
    %c0_21 = arith.constant 0 : index
    %c0_22 = arith.constant 0 : index
    %44 = vector.load %arg9[%c0_20, %c0_21, %c0_22] : memref<2x128x128xbf16, #tpu.memory_space<vmem>>, vector<1x128x128xbf16>
    %45 = vector.shape_cast %44 : vector<1x128x128xbf16> to vector<128x128xbf16>
    %46 = arith.truncf %43 : vector<32x128xf32> to vector<32x128xbf16>
    %cst_23 = arith.constant dense<0.000000e+00> : vector<32x128xf32>
    %47 = tpu.matmul %46, %45, %cst_23 {dimension_numbers = #tpu.dot_dimension_numbers<[1], [0], [0], [1], [0, 0, 1, 1], [], []>} : vector<32x128xbf16>, vector<128x128xbf16>, vector<32x128xf32> -> vector<32x128xf32>
    %c0_24 = arith.constant 0 : index
    %c0_25 = arith.constant 0 : index
    %c0_26 = arith.constant 0 : index
    %48 = vector.load %arg10[%c0_24, %c0_25, %c0_26] : memref<2x1x128xf32, #tpu.memory_space<vmem>>, vector<1x1x128xf32>
    %49 = vector.shape_cast %48 : vector<1x1x128xf32> to vector<1x128xf32>
    %50 = vector.broadcast %49 : vector<1x128xf32> to vector<32x128xf32>
    %51 = arith.addf %47, %50 : vector<32x128xf32>
    %cst_27 = arith.constant 0.000000e+00 : f32
    %52 = vector.broadcast %cst_27 : f32 to vector<32x128xf32>
    %53 = arith.maximumf %51, %52 : vector<32x128xf32>
    %c0_28 = arith.constant 0 : index
    %c0_29 = arith.constant 0 : index
    %c0_30 = arith.constant 0 : index
    %54 = vector.load %arg11[%c0_28, %c0_29, %c0_30] : memref<2x128x128xbf16, #tpu.memory_space<vmem>>, vector<1x128x128xbf16>
    %55 = vector.shape_cast %54 : vector<1x128x128xbf16> to vector<128x128xbf16>
    %56 = arith.truncf %53 : vector<32x128xf32> to vector<32x128xbf16>
    %cst_31 = arith.constant dense<0.000000e+00> : vector<32x128xf32>
    %57 = tpu.matmul %56, %55, %cst_31 {dimension_numbers = #tpu.dot_dimension_numbers<[1], [0], [0], [1], [0, 0, 1, 1], [], []>} : vector<32x128xbf16>, vector<128x128xbf16>, vector<32x128xf32> -> vector<32x128xf32>
    %c0_32 = arith.constant 0 : index
    %c0_33 = arith.constant 0 : index
    %c0_34 = arith.constant 0 : index
    %58 = vector.load %arg12[%c0_32, %c0_33, %c0_34] : memref<2x1x128xf32, #tpu.memory_space<vmem>>, vector<1x1x128xf32>
    %59 = vector.shape_cast %58 : vector<1x1x128xf32> to vector<1x128xf32>
    %60 = vector.broadcast %59 : vector<1x128xf32> to vector<32x128xf32>
    %61 = arith.addf %57, %60 : vector<32x128xf32>
    %62 = arith.truncf %61 : vector<32x128xf32> to vector<32x128xbf16>
    %cst_35 = arith.constant dense<0.000000e+00> : vector<16x128xf32>
    %63 = tpu.matmul %13, %62, %cst_35 {dimension_numbers = #tpu.dot_dimension_numbers<[1], [0], [0], [1], [0, 0, 1, 1], [], []>} : vector<16x32xbf16>, vector<32x128xbf16>, vector<16x128xf32> -> vector<16x128xf32>
    %c32_i32_36 = arith.constant 32 : i32
    %64 = tpu.dynamic_rotate %63 by %c32_i32_36 dim 1 : vector<16x128xf32>, i32 -> vector<16x128xf32>
    %65 = arith.addf %35, %64 : vector<16x128xf32>
    %c0_37 = arith.constant 0 : index
    %c0_38 = arith.constant 0 : index
    %c0_39 = arith.constant 0 : index
    %66 = vector.load %arg13[%c0_37, %c0_38, %c0_39] : memref<2x128x128xbf16, #tpu.memory_space<vmem>>, vector<1x128x128xbf16>
    %67 = vector.shape_cast %66 : vector<1x128x128xbf16> to vector<128x128xbf16>
    %68 = arith.truncf %65 : vector<16x128xf32> to vector<16x128xbf16>
    %cst_40 = arith.constant dense<0.000000e+00> : vector<16x128xf32>
    %69 = tpu.matmul %68, %67, %cst_40 {dimension_numbers = #tpu.dot_dimension_numbers<[1], [0], [0], [1], [0, 0, 1, 1], [], []>} : vector<16x128xbf16>, vector<128x128xbf16>, vector<16x128xf32> -> vector<16x128xf32>
    %c0_41 = arith.constant 0 : index
    %c0_42 = arith.constant 0 : index
    %c0_43 = arith.constant 0 : index
    %70 = vector.load %arg14[%c0_41, %c0_42, %c0_43] : memref<2x1x128xf32, #tpu.memory_space<vmem>>, vector<1x1x128xf32>
    %71 = vector.shape_cast %70 : vector<1x1x128xf32> to vector<1x128xf32>
    %72 = vector.broadcast %71 : vector<1x128xf32> to vector<16x128xf32>
    %73 = arith.addf %69, %72 : vector<16x128xf32>
    %cst_44 = arith.constant 0.000000e+00 : f32
    %74 = vector.broadcast %cst_44 : f32 to vector<16x128xf32>
    %75 = arith.maximumf %73, %74 : vector<16x128xf32>
    %c0_45 = arith.constant 0 : index
    %c0_46 = arith.constant 0 : index
    %c0_47 = arith.constant 0 : index
    %76 = vector.load %arg15[%c0_45, %c0_46, %c0_47] : memref<2x128x128xbf16, #tpu.memory_space<vmem>>, vector<1x128x128xbf16>
    %77 = vector.shape_cast %76 : vector<1x128x128xbf16> to vector<128x128xbf16>
    %78 = arith.truncf %75 : vector<16x128xf32> to vector<16x128xbf16>
    %cst_48 = arith.constant dense<0.000000e+00> : vector<16x128xf32>
    %79 = tpu.matmul %78, %77, %cst_48 {dimension_numbers = #tpu.dot_dimension_numbers<[1], [0], [0], [1], [0, 0, 1, 1], [], []>} : vector<16x128xbf16>, vector<128x128xbf16>, vector<16x128xf32> -> vector<16x128xf32>
    %c0_49 = arith.constant 0 : index
    %c0_50 = arith.constant 0 : index
    %c0_51 = arith.constant 0 : index
    %80 = vector.load %arg16[%c0_49, %c0_50, %c0_51] : memref<2x1x128xf32, #tpu.memory_space<vmem>>, vector<1x1x128xf32>
    %81 = vector.shape_cast %80 : vector<1x1x128xf32> to vector<1x128xf32>
    %82 = vector.broadcast %81 : vector<1x128xf32> to vector<16x128xf32>
    %83 = arith.addf %79, %82 : vector<16x128xf32>
    %84 = arith.truncf %83 : vector<16x128xf32> to vector<16x128xbf16>
    %cst_52 = arith.constant dense<0.000000e+00> : vector<64x128xf32>
    %85 = tpu.matmul %6, %84, %cst_52 {dimension_numbers = #tpu.dot_dimension_numbers<[1], [0], [0], [1], [0, 0, 1, 1], [], []>} : vector<64x16xbf16>, vector<16x128xbf16>, vector<64x128xf32> -> vector<64x128xf32>
    %86 = vector.extract_strided_slice %85 {offsets = [0, 0], sizes = [32, 128], strides = [1, 1]} : vector<64x128xf32> to vector<32x128xf32>
    %87 = vector.extract_strided_slice %85 {offsets = [32, 0], sizes = [32, 128], strides = [1, 1]} : vector<64x128xf32> to vector<32x128xf32>
    %c32_i32_53 = arith.constant 32 : i32
    %88 = tpu.dynamic_rotate %87 by %c32_i32_53 dim 1 : vector<32x128xf32>, i32 -> vector<32x128xf32>
    %89 = arith.addf %86, %88 : vector<32x128xf32>
    %90 = arith.addf %89, %36 : vector<32x128xf32>
    %c1 = arith.constant 1 : index
    %c0_54 = arith.constant 0 : index
    %c0_55 = arith.constant 0 : index
    %91 = vector.load %arg9[%c1, %c0_54, %c0_55] : memref<2x128x128xbf16, #tpu.memory_space<vmem>>, vector<1x128x128xbf16>
    %92 = vector.shape_cast %91 : vector<1x128x128xbf16> to vector<128x128xbf16>
    %93 = arith.truncf %90 : vector<32x128xf32> to vector<32x128xbf16>
    %cst_56 = arith.constant dense<0.000000e+00> : vector<32x128xf32>
    %94 = tpu.matmul %93, %92, %cst_56 {dimension_numbers = #tpu.dot_dimension_numbers<[1], [0], [0], [1], [0, 0, 1, 1], [], []>} : vector<32x128xbf16>, vector<128x128xbf16>, vector<32x128xf32> -> vector<32x128xf32>
    %c1_57 = arith.constant 1 : index
    %c0_58 = arith.constant 0 : index
    %c0_59 = arith.constant 0 : index
    %95 = vector.load %arg10[%c1_57, %c0_58, %c0_59] : memref<2x1x128xf32, #tpu.memory_space<vmem>>, vector<1x1x128xf32>
    %96 = vector.shape_cast %95 : vector<1x1x128xf32> to vector<1x128xf32>
    %97 = vector.broadcast %96 : vector<1x128xf32> to vector<32x128xf32>
    %98 = arith.addf %94, %97 : vector<32x128xf32>
    %cst_60 = arith.constant 0.000000e+00 : f32
    %99 = vector.broadcast %cst_60 : f32 to vector<32x128xf32>
    %100 = arith.maximumf %98, %99 : vector<32x128xf32>
    %c1_61 = arith.constant 1 : index
    %c0_62 = arith.constant 0 : index
    %c0_63 = arith.constant 0 : index
    %101 = vector.load %arg11[%c1_61, %c0_62, %c0_63] : memref<2x128x128xbf16, #tpu.memory_space<vmem>>, vector<1x128x128xbf16>
    %102 = vector.shape_cast %101 : vector<1x128x128xbf16> to vector<128x128xbf16>
    %103 = arith.truncf %100 : vector<32x128xf32> to vector<32x128xbf16>
    %cst_64 = arith.constant dense<0.000000e+00> : vector<32x128xf32>
    %104 = tpu.matmul %103, %102, %cst_64 {dimension_numbers = #tpu.dot_dimension_numbers<[1], [0], [0], [1], [0, 0, 1, 1], [], []>} : vector<32x128xbf16>, vector<128x128xbf16>, vector<32x128xf32> -> vector<32x128xf32>
    %c1_65 = arith.constant 1 : index
    %c0_66 = arith.constant 0 : index
    %c0_67 = arith.constant 0 : index
    %105 = vector.load %arg12[%c1_65, %c0_66, %c0_67] : memref<2x1x128xf32, #tpu.memory_space<vmem>>, vector<1x1x128xf32>
    %106 = vector.shape_cast %105 : vector<1x1x128xf32> to vector<1x128xf32>
    %107 = vector.broadcast %106 : vector<1x128xf32> to vector<32x128xf32>
    %108 = arith.addf %104, %107 : vector<32x128xf32>
    %109 = arith.truncf %108 : vector<32x128xf32> to vector<32x128xbf16>
    %cst_68 = arith.constant dense<0.000000e+00> : vector<16x128xf32>
    %110 = tpu.matmul %13, %109, %cst_68 {dimension_numbers = #tpu.dot_dimension_numbers<[1], [0], [0], [1], [0, 0, 1, 1], [], []>} : vector<16x32xbf16>, vector<32x128xbf16>, vector<16x128xf32> -> vector<16x128xf32>
    %c32_i32_69 = arith.constant 32 : i32
    %111 = tpu.dynamic_rotate %110 by %c32_i32_69 dim 1 : vector<16x128xf32>, i32 -> vector<16x128xf32>
    %112 = arith.addf %83, %111 : vector<16x128xf32>
    %c1_70 = arith.constant 1 : index
    %c0_71 = arith.constant 0 : index
    %c0_72 = arith.constant 0 : index
    %113 = vector.load %arg13[%c1_70, %c0_71, %c0_72] : memref<2x128x128xbf16, #tpu.memory_space<vmem>>, vector<1x128x128xbf16>
    %114 = vector.shape_cast %113 : vector<1x128x128xbf16> to vector<128x128xbf16>
    %115 = arith.truncf %112 : vector<16x128xf32> to vector<16x128xbf16>
    %cst_73 = arith.constant dense<0.000000e+00> : vector<16x128xf32>
    %116 = tpu.matmul %115, %114, %cst_73 {dimension_numbers = #tpu.dot_dimension_numbers<[1], [0], [0], [1], [0, 0, 1, 1], [], []>} : vector<16x128xbf16>, vector<128x128xbf16>, vector<16x128xf32> -> vector<16x128xf32>
    %c1_74 = arith.constant 1 : index
    %c0_75 = arith.constant 0 : index
    %c0_76 = arith.constant 0 : index
    %117 = vector.load %arg14[%c1_74, %c0_75, %c0_76] : memref<2x1x128xf32, #tpu.memory_space<vmem>>, vector<1x1x128xf32>
    %118 = vector.shape_cast %117 : vector<1x1x128xf32> to vector<1x128xf32>
    %119 = vector.broadcast %118 : vector<1x128xf32> to vector<16x128xf32>
    %120 = arith.addf %116, %119 : vector<16x128xf32>
    %cst_77 = arith.constant 0.000000e+00 : f32
    %121 = vector.broadcast %cst_77 : f32 to vector<16x128xf32>
    %122 = arith.maximumf %120, %121 : vector<16x128xf32>
    %c1_78 = arith.constant 1 : index
    %c0_79 = arith.constant 0 : index
    %c0_80 = arith.constant 0 : index
    %123 = vector.load %arg15[%c1_78, %c0_79, %c0_80] : memref<2x128x128xbf16, #tpu.memory_space<vmem>>, vector<1x128x128xbf16>
    %124 = vector.shape_cast %123 : vector<1x128x128xbf16> to vector<128x128xbf16>
    %125 = arith.truncf %122 : vector<16x128xf32> to vector<16x128xbf16>
    %cst_81 = arith.constant dense<0.000000e+00> : vector<16x128xf32>
    %126 = tpu.matmul %125, %124, %cst_81 {dimension_numbers = #tpu.dot_dimension_numbers<[1], [0], [0], [1], [0, 0, 1, 1], [], []>} : vector<16x128xbf16>, vector<128x128xbf16>, vector<16x128xf32> -> vector<16x128xf32>
    %c1_82 = arith.constant 1 : index
    %c0_83 = arith.constant 0 : index
    %c0_84 = arith.constant 0 : index
    %127 = vector.load %arg16[%c1_82, %c0_83, %c0_84] : memref<2x1x128xf32, #tpu.memory_space<vmem>>, vector<1x1x128xf32>
    %128 = vector.shape_cast %127 : vector<1x1x128xf32> to vector<1x128xf32>
    %129 = vector.broadcast %128 : vector<1x128xf32> to vector<16x128xf32>
    %130 = arith.addf %126, %129 : vector<16x128xf32>
    %131 = arith.truncf %130 : vector<16x128xf32> to vector<16x128xbf16>
    %cst_85 = arith.constant dense<0.000000e+00> : vector<8x128xf32>
    %132 = tpu.matmul %20, %131, %cst_85 {dimension_numbers = #tpu.dot_dimension_numbers<[1], [0], [0], [1], [0, 0, 1, 1], [], []>} : vector<8x16xbf16>, vector<16x128xbf16>, vector<8x128xf32> -> vector<8x128xf32>
    %c0_86 = arith.constant 0 : index
    %c0_87 = arith.constant 0 : index
    %133 = vector.load %arg17[%c0_86, %c0_87] : memref<128x128xbf16, #tpu.memory_space<vmem>>, vector<128x128xbf16>
    %134 = arith.truncf %132 : vector<8x128xf32> to vector<8x128xbf16>
    %cst_88 = arith.constant dense<0.000000e+00> : vector<8x128xf32>
    %135 = tpu.matmul %134, %133, %cst_88 {dimension_numbers = #tpu.dot_dimension_numbers<[1], [0], [0], [1], [0, 0, 1, 1], [], []>} : vector<8x128xbf16>, vector<128x128xbf16>, vector<8x128xf32> -> vector<8x128xf32>
    %c0_89 = arith.constant 0 : index
    %c0_90 = arith.constant 0 : index
    %136 = vector.load %arg18[%c0_89, %c0_90] : memref<1x128xf32, #tpu.memory_space<vmem>>, vector<1x128xf32>
    %137 = vector.broadcast %136 : vector<1x128xf32> to vector<8x128xf32>
    %138 = arith.addf %135, %137 : vector<8x128xf32>
    %cst_91 = arith.constant 0.000000e+00 : f32
    %139 = vector.broadcast %cst_91 : f32 to vector<8x128xf32>
    %140 = arith.maximumf %138, %139 : vector<8x128xf32>
    %c0_92 = arith.constant 0 : index
    %c0_93 = arith.constant 0 : index
    %141 = vector.load %arg19[%c0_92, %c0_93] : memref<128x128xbf16, #tpu.memory_space<vmem>>, vector<128x128xbf16>
    %142 = arith.truncf %140 : vector<8x128xf32> to vector<8x128xbf16>
    %cst_94 = arith.constant dense<0.000000e+00> : vector<8x128xf32>
    %143 = tpu.matmul %142, %141, %cst_94 {dimension_numbers = #tpu.dot_dimension_numbers<[1], [0], [0], [1], [0, 0, 1, 1], [], []>} : vector<8x128xbf16>, vector<128x128xbf16>, vector<8x128xf32> -> vector<8x128xf32>
    %c0_95 = arith.constant 0 : index
    %c0_96 = arith.constant 0 : index
    %144 = vector.load %arg20[%c0_95, %c0_96] : memref<1x128xf32, #tpu.memory_space<vmem>>, vector<1x128xf32>
    %145 = vector.broadcast %144 : vector<1x128xf32> to vector<8x128xf32>
    %146 = arith.addf %143, %145 : vector<8x128xf32>
    %c0_97 = arith.constant 0 : index
    %c0_98 = arith.constant 0 : index
    %147 = vector.load %arg21[%c0_97, %c0_98] : memref<8x128xf32, #tpu.memory_space<vmem>>, vector<8x128xf32>
    tpu.vector_store %arg21[%c0_97, %c0_98], %146 {strides = array<i32>} : memref<8x128xf32, #tpu.memory_space<vmem>>, vector<8x128xf32>,
    return
  }
}

</mosaic_0001>

<llo_original>
// kernel: mpnn_forward.1
$region0: #{mpnn_forward.1}
  #allocation0 [shape = 'u32[]', space=smem, size = 0x4, offset = 0x4, fixed_abs, tag = 'smem constant byte address 0x4 - core index']
  #allocation1 [shape = 'u32[144,128]{1,0:T(1,128)}', space=vmem, size = 0x12000, scoped, tag = 'internal scratch']
  %s0 = inlined_call_operand.vmem [shape: f32[16,128], index: 0, kind: input, shape index: {}]
  %s1 = inlined_call_operand.vmem [shape: f32[32,128], index: 1, kind: input, shape index: {}]
  %s2 = inlined_call_operand.vmem [shape: s32[64,1], index: 2, kind: input, shape index: {}]
  %s3 = inlined_call_operand.vmem [shape: s32[1,32], index: 3, kind: input, shape index: {}]
  %s4 = inlined_call_operand.vmem [shape: s32[1,16], index: 4, kind: input, shape index: {}]
  %s5 = inlined_call_operand.hbm [shape: bf16[128,128], index: 5, kind: input, shape index: {}]
  %s6 = inlined_call_operand.hbm [shape: f32[1,128], index: 6, kind: input, shape index: {}]
  %s7 = inlined_call_operand.hbm [shape: bf16[128,128], index: 7, kind: input, shape index: {}]
  %s8 = inlined_call_operand.hbm [shape: f32[1,128], index: 8, kind: input, shape index: {}]
  %s9 = inlined_call_operand.vmem [shape: bf16[2,128,128], index: 9, kind: input, shape index: {}]
  %s10 = inlined_call_operand.hbm [shape: f32[2,1,128], index: 10, kind: input, shape index: {}]
  %s11 = inlined_call_operand.vmem [shape: bf16[2,128,128], index: 11, kind: input, shape index: {}]
  %s12 = inlined_call_operand.hbm [shape: f32[2,1,128], index: 12, kind: input, shape index: {}]
  %s13 = inlined_call_operand.vmem [shape: bf16[2,128,128], index: 13, kind: input, shape index: {}]
  %s14 = inlined_call_operand.hbm [shape: f32[2,1,128], index: 14, kind: input, shape index: {}]
  %s15 = inlined_call_operand.hbm [shape: bf16[2,128,128], index: 15, kind: input, shape index: {}]
  %s16 = inlined_call_operand.vmem [shape: f32[2,1,128], index: 16, kind: input, shape index: {}]
  %s17 = inlined_call_operand.hbm [shape: bf16[128,128], index: 17, kind: input, shape index: {}]
  %s18 = inlined_call_operand.hbm [shape: f32[1,128], index: 18, kind: input, shape index: {}]
  %s19 = inlined_call_operand.hbm [shape: bf16[128,128], index: 19, kind: input, shape index: {}]
  %s20 = inlined_call_operand.hbm [shape: f32[1,128], index: 20, kind: input, shape index: {}]
  %s21 = inlined_call_operand.vmem [shape: f32[8,128], index: 21, kind: output, shape index: {}]
  %s22 = sld [smem:[#allocation0]]
  $region142: #{mpnn_forward.1} parent=0
    _
  %s24 = ssub.s32 1, %s22
  %s25 = scalar_select 0, %s24, %s22
  $region1: #{mpnn_forward.1} parent=0
    #allocation2 [shape = 'u8[32768]{0}', space=vmem, size = 0x8000, scoped, tag = 'input window, operand 5, single buffered']
    #allocation3 [shape = 's32[1]{0}', space=sflag, size = 0x4, scoped, tag = 'scoped memory for mpnn_forward.1']
    #allocation4 [shape = 'u8[512]{0}', space=vmem, size = 0x400, scoped, tag = 'input window, operand 6, single buffered']
    #allocation5 [shape = 's32[1]{0}', space=sflag, size = 0x4, scoped, tag = 'scoped memory for mpnn_forward.1']
    #allocation6 [shape = 'u8[32768]{0}', space=vmem, size = 0x8000, scoped, tag = 'input window, operand 7, single buffered']
    #allocation7 [shape = 'u8[512]{0}', space=vmem, size = 0x400, scoped, tag = 'input window, operand 8, single buffered']
    #allocation8 [shape = 's32[1]{0}', space=sflag, size = 0x4, scoped, tag = 'scoped memory for mpnn_forward.1']
    #allocation9 [shape = 'u8[1024]{0}', space=vmem, size = 0x400, scoped, tag = 'input window, operand 10, single buffered']
    #allocation10 [shape = 'u8[1024]{0}', space=vmem, size = 0x400, scoped, tag = 'input window, operand 12, single buffered']
    #allocation11 [shape = 's32[1]{0}', space=sflag, size = 0x4, scoped, tag = 'scoped memory for mpnn_forward.1']
    #allocation12 [shape = 'u8[1024]{0}', space=vmem, size = 0x400, scoped, tag = 'input window, operand 14, single buffered']
    #allocation13 [shape = 'u8[65536]{0}', space=vmem, size = 0x10000, scoped, tag = 'input window, operand 15, single buffered']
    #allocation14 [shape = 's32[1]{0}', space=sflag, size = 0x4, scoped, tag = 'scoped memory for mpnn_forward.1']
    #allocation15 [shape = 'u8[32768]{0}', space=vmem, size = 0x8000, scoped, tag = 'input window, operand 17, single buffered']
    #allocation16 [shape = 'u8[512]{0}', space=vmem, size = 0x400, scoped, tag = 'input window, operand 18, single buffered']
    #allocation17 [shape = 's32[1]{0}', space=sflag, size = 0x4, scoped, tag = 'scoped memory for mpnn_forward.1']
    #allocation18 [shape = 'u8[32768]{0}', space=vmem, size = 0x8000, scoped, tag = 'input window, operand 19, single buffered']
    #allocation19 [shape = 'u8[512]{0}', space=vmem, size = 0x400, scoped, tag = 'input window, operand 20, single buffered']
    #allocation20 [shape = 's32[1]{0}', space=sflag, size = 0x4, scoped, tag = 'scoped memory for mpnn_forward.1']
    %26 = vsyncpa [#allocation3], 0
    %27 = vsyncpa [#allocation5], 0
    %28 = vsyncpa [#allocation8], 0
    %29 = vsyncpa [#allocation11], 0
    %30 = vsyncpa [#allocation14], 0
    %31 = vsyncpa [#allocation17], 0
    %32 = vsyncpa [#allocation20], 0
    // Predicated region
    $region2: #{mpnn_forward.1} parent=1 // pred_check
      _
    $region3: #{mpnn_forward.1} parent=1 // pred_check_branch
      %34 = sbr.rel (0) target = $region5
    $region4: #{mpnn_forward.1} parent=1 // pred_region
      _
    $region5: #{mpnn_forward.1} parent=1 // pred_fallthru
      _
    // Predicated region
    $region6: #{mpnn_forward.1} parent=1 // pred_check
      _
    $region7: #{mpnn_forward.1} parent=1 // pred_check_branch
      %36 = sbr.rel (0) target = $region9
    $region8: #{mpnn_forward.1} parent=1 // pred_region
      _
    $region9: #{mpnn_forward.1} parent=1 // pred_fallthru
      _
    // Predicated region
    $region10: #{mpnn_forward.1} parent=1 // pred_check
      _
    $region11: #{mpnn_forward.1} parent=1 // pred_check_branch
      %38 = sbr.rel (0) target = $region13
    $region12: #{mpnn_forward.1} parent=1 // pred_region
      _
    $region13: #{mpnn_forward.1} parent=1 // pred_fallthru
      _
    // Predicated region
    $region14: #{mpnn_forward.1} parent=1 // pred_check
      _
    $region15: #{mpnn_forward.1} parent=1 // pred_check_branch
      %40 = sbr.rel (0) target = $region17
    $region16: #{mpnn_forward.1} parent=1 // pred_region
      _
    $region17: #{mpnn_forward.1} parent=1 // pred_fallthru
      _
    // Predicated region
    $region18: #{mpnn_forward.1} parent=1 // pred_check
      _
    $region19: #{mpnn_forward.1} parent=1 // pred_check_branch
      %42 = sbr.rel (0) target = $region21
    $region20: #{mpnn_forward.1} parent=1 // pred_region
      _
    $region21: #{mpnn_forward.1} parent=1 // pred_fallthru
      _
    // Predicated region
    $region22: #{mpnn_forward.1} parent=1 // pred_check
      _
    $region23: #{mpnn_forward.1} parent=1 // pred_check_branch
      %44 = sbr.rel (0) target = $region25
    $region24: #{mpnn_forward.1} parent=1 // pred_region
      %s46 = ssub.s32 1024, 1024
      %47 = vsyncadd [#allocation3], %s46
      %s48 = sshll.u32 [#allocation2], 4
      %s49 = int_to_ptr.vmem [resolvable:$true] %s48
      %54 = dma.hbm_to_vmem [thread:$0]  %s5, 1024, %s49, [#allocation3], 64, 64, 4
    $region25: #{mpnn_forward.1} parent=1 // pred_fallthru
      _
    // Predicated region
    $region26: #{mpnn_forward.1} parent=1 // pred_check
      _
    $region27: #{mpnn_forward.1} parent=1 // pred_check_branch
      %56 = sbr.rel (0) target = $region29
    $region28: #{mpnn_forward.1} parent=1 // pred_region
      %s58 = ssub.s32 16, 16
      %59 = vsyncadd [#allocation5], %s58
      %s61 = sshll.u32 [#allocation4], 4
      %s62 = int_to_ptr.vmem [resolvable:$true] %s61
      %64 = dma.hbm_to_vmem [thread:$0]  %s6, 16, %s62, [#allocation5]
    $region29: #{mpnn_forward.1} parent=1 // pred_fallthru
      _
    // Predicated region
    $region30: #{mpnn_forward.1} parent=1 // pred_check
      _
    $region31: #{mpnn_forward.1} parent=1 // pred_check_branch
      %66 = sbr.rel (0) target = $region33
    $region32: #{mpnn_forward.1} parent=1 // pred_region
      %s68 = ssub.s32 1024, 1024
      %69 = vsyncadd [#allocation5], %s68
      %s70 = sshll.u32 [#allocation6], 4
      %s71 = int_to_ptr.vmem [resolvable:$true] %s70
      %76 = dma.hbm_to_vmem [thread:$0]  %s7, 1024, %s71, [#allocation5], 64, 64, 4
    $region33: #{mpnn_forward.1} parent=1 // pred_fallthru
      _
    // Predicated region
    $region34: #{mpnn_forward.1} parent=1 // pred_check
      _
    $region35: #{mpnn_forward.1} parent=1 // pred_check_branch
      %78 = sbr.rel (0) target = $region37
    $region36: #{mpnn_forward.1} parent=1 // pred_region
      %s80 = ssub.s32 16, 16
      %81 = vsyncadd [#allocation8], %s80
      %s83 = sshll.u32 [#allocation7], 4
      %s84 = int_to_ptr.vmem [resolvable:$true] %s83
      %86 = dma.hbm_to_vmem [thread:$0]  %s8, 16, %s84, [#allocation8]
    $region37: #{mpnn_forward.1} parent=1 // pred_fallthru
      _
    // Predicated region
    $region38: #{mpnn_forward.1} parent=1 // pred_check
      _
    $region39: #{mpnn_forward.1} parent=1 // pred_check_branch
      %88 = sbr.rel (0) target = $region41
    $region40: #{mpnn_forward.1} parent=1 // pred_region
      _
    $region41: #{mpnn_forward.1} parent=1 // pred_fallthru
      _
    // Predicated region
    $region42: #{mpnn_forward.1} parent=1 // pred_check
      _
    $region43: #{mpnn_forward.1} parent=1 // pred_check_branch
      %90 = sbr.rel (0) target = $region45
    $region44: #{mpnn_forward.1} parent=1 // pred_region
      %s92 = ssub.s32 32, 32
      %93 = vsyncadd [#allocation8], %s92
      %s94 = sshll.u32 [#allocation9], 4
      %s95 = int_to_ptr.vmem [resolvable:$true] %s94
      %100 = dma.hbm_to_vmem [thread:$0]  %s10, 32, %s95, [#allocation8], 16, 16, 1
    $region45: #{mpnn_forward.1} parent=1 // pred_fallthru
      _
    // Predicated region
    $region46: #{mpnn_forward.1} parent=1 // pred_check
      _
    $region47: #{mpnn_forward.1} parent=1 // pred_check_branch
      %102 = sbr.rel (0) target = $region49
    $region48: #{mpnn_forward.1} parent=1 // pred_region
      _
    $region49: #{mpnn_forward.1} parent=1 // pred_fallthru
      _
    // Predicated region
    $region50: #{mpnn_forward.1} parent=1 // pred_check
      _
    $region51: #{mpnn_forward.1} parent=1 // pred_check_branch
      %104 = sbr.rel (0) target = $region53
    $region52: #{mpnn_forward.1} parent=1 // pred_region
      %s106 = ssub.s32 32, 32
      %107 = vsyncadd [#allocation11], %s106
      %s108 = sshll.u32 [#allocation10], 4
      %s109 = int_to_ptr.vmem [resolvable:$true] %s108
      %114 = dma.hbm_to_vmem [thread:$0]  %s12, 32, %s109, [#allocation11], 16, 16, 1
    $region53: #{mpnn_forward.1} parent=1 // pred_fallthru
      _
    // Predicated region
    $region54: #{mpnn_forward.1} parent=1 // pred_check
      _
    $region55: #{mpnn_forward.1} parent=1 // pred_check_branch
      %116 = sbr.rel (0) target = $region57
    $region56: #{mpnn_forward.1} parent=1 // pred_region
      _
    $region57: #{mpnn_forward.1} parent=1 // pred_fallthru
      _
    // Predicated region
    $region58: #{mpnn_forward.1} parent=1 // pred_check
      _
    $region59: #{mpnn_forward.1} parent=1 // pred_check_branch
      %118 = sbr.rel (0) target = $region61
    $region60: #{mpnn_forward.1} parent=1 // pred_region
      %s120 = ssub.s32 32, 32
      %121 = vsyncadd [#allocation11], %s120
      %s122 = sshll.u32 [#allocation12], 4
      %s123 = int_to_ptr.vmem [resolvable:$true] %s122
      %128 = dma.hbm_to_vmem [thread:$0]  %s14, 32, %s123, [#allocation11], 16, 16, 1
    $region61: #{mpnn_forward.1} parent=1 // pred_fallthru
      _
    // Predicated region
    $region62: #{mpnn_forward.1} parent=1 // pred_check
      _
    $region63: #{mpnn_forward.1} parent=1 // pred_check_branch
      %130 = sbr.rel (0) target = $region65
    $region64: #{mpnn_forward.1} parent=1 // pred_region
      %s132 = ssub.s32 2048, 2048
      %133 = vsyncadd [#allocation14], %s132
      %s134 = sshll.u32 [#allocation13], 4
      %s135 = int_to_ptr.vmem [resolvable:$true] %s134
      %140 = dma.hbm_to_vmem [thread:$0]  %s15, 2048, %s135, [#allocation14], 64, 64, 4
    $region65: #{mpnn_forward.1} parent=1 // pred_fallthru
      _
    // Predicated region
    $region66: #{mpnn_forward.1} parent=1 // pred_check
      _
    $region67: #{mpnn_forward.1} parent=1 // pred_check_branch
      %142 = sbr.rel (0) target = $region69
    $region68: #{mpnn_forward.1} parent=1 // pred_region
      _
    $region69: #{mpnn_forward.1} parent=1 // pred_fallthru
      _
    // Predicated region
    $region70: #{mpnn_forward.1} parent=1 // pred_check
      _
    $region71: #{mpnn_forward.1} parent=1 // pred_check_branch
      %144 = sbr.rel (0) target = $region73
    $region72: #{mpnn_forward.1} parent=1 // pred_region
      %s146 = ssub.s32 1024, 1024
      %147 = vsyncadd [#allocation14], %s146
      %s148 = sshll.u32 [#allocation15], 4
      %s149 = int_to_ptr.vmem [resolvable:$true] %s148
      %154 = dma.hbm_to_vmem [thread:$0]  %s17, 1024, %s149, [#allocation14], 64, 64, 4
    $region73: #{mpnn_forward.1} parent=1 // pred_fallthru
      _
    // Predicated region
    $region74: #{mpnn_forward.1} parent=1 // pred_check
      _
    $region75: #{mpnn_forward.1} parent=1 // pred_check_branch
      %156 = sbr.rel (0) target = $region77
    $region76: #{mpnn_forward.1} parent=1 // pred_region
      %s158 = ssub.s32 16, 16
      %159 = vsyncadd [#allocation17], %s158
      %s161 = sshll.u32 [#allocation16], 4
      %s162 = int_to_ptr.vmem [resolvable:$true] %s161
      %164 = dma.hbm_to_vmem [thread:$0]  %s18, 16, %s162, [#allocation17]
    $region77: #{mpnn_forward.1} parent=1 // pred_fallthru
      _
    // Predicated region
    $region78: #{mpnn_forward.1} parent=1 // pred_check
      _
    $region79: #{mpnn_forward.1} parent=1 // pred_check_branch
      %166 = sbr.rel (0) target = $region81
    $region80: #{mpnn_forward.1} parent=1 // pred_region
      %s168 = ssub.s32 1024, 1024
      %169 = vsyncadd [#allocation17], %s168
      %s170 = sshll.u32 [#allocation18], 4
      %s171 = int_to_ptr.vmem [resolvable:$true] %s170
      %176 = dma.hbm_to_vmem [thread:$0]  %s19, 1024, %s171, [#allocation17], 64, 64, 4
    $region81: #{mpnn_forward.1} parent=1 // pred_fallthru
      _
    // Predicated region
    $region82: #{mpnn_forward.1} parent=1 // pred_check
      _
    $region83: #{mpnn_forward.1} parent=1 // pred_check_branch
      %178 = sbr.rel (0) target = $region85
    $region84: #{mpnn_forward.1} parent=1 // pred_region
      %s180 = ssub.s32 16, 16
      %181 = vsyncadd [#allocation20], %s180
      %s183 = sshll.u32 [#allocation19], 4
      %s184 = int_to_ptr.vmem [resolvable:$true] %s183
      %186 = dma.hbm_to_vmem [thread:$0]  %s20, 16, %s184, [#allocation20]
    $region85: #{mpnn_forward.1} parent=1 // pred_fallthru
      _
    // Predicated region
    $region86: #{mpnn_forward.1} parent=1 // pred_check
      _
    $region87: #{mpnn_forward.1} parent=1 // pred_check_branch
      %188 = sbr.rel (0) target = $region89
    $region88: #{mpnn_forward.1} parent=1 // pred_region
      %189 = dma.done [#allocation3], 1024
    $region89: #{mpnn_forward.1} parent=1 // pred_fallthru
      _
    // Predicated region
    $region90: #{mpnn_forward.1} parent=1 // pred_check
      _
    $region91: #{mpnn_forward.1} parent=1 // pred_check_branch
      %191 = sbr.rel (0) target = $region93
    $region92: #{mpnn_forward.1} parent=1 // pred_region
      %192 = dma.done [#allocation5], 16
    $region93: #{mpnn_forward.1} parent=1 // pred_fallthru
      _
    // Predicated region
    $region94: #{mpnn_forward.1} parent=1 // pred_check
      _
    $region95: #{mpnn_forward.1} parent=1 // pred_check_branch
      %194 = sbr.rel (0) target = $region97
    $region96: #{mpnn_forward.1} parent=1 // pred_region
      %195 = dma.done [#allocation5], 1024
    $region97: #{mpnn_forward.1} parent=1 // pred_fallthru
      _
    // Predicated region
    $region98: #{mpnn_forward.1} parent=1 // pred_check
      _
    $region99: #{mpnn_forward.1} parent=1 // pred_check_branch
      %197 = sbr.rel (0) target = $region101
    $region100: #{mpnn_forward.1} parent=1 // pred_region
      %198 = dma.done [#allocation8], 16
    $region101: #{mpnn_forward.1} parent=1 // pred_fallthru
      _
    // Predicated region
    $region102: #{mpnn_forward.1} parent=1 // pred_check
      _
    $region103: #{mpnn_forward.1} parent=1 // pred_check_branch
      %200 = sbr.rel (0) target = $region105
    $region104: #{mpnn_forward.1} parent=1 // pred_region
      %201 = dma.done [#allocation8], 32
    $region105: #{mpnn_forward.1} parent=1 // pred_fallthru
      _
    // Predicated region
    $region106: #{mpnn_forward.1} parent=1 // pred_check
      _
    $region107: #{mpnn_forward.1} parent=1 // pred_check_branch
      %203 = sbr.rel (0) target = $region109
    $region108: #{mpnn_forward.1} parent=1 // pred_region
      %204 = dma.done [#allocation11], 32
    $region109: #{mpnn_forward.1} parent=1 // pred_fallthru
      _
    // Predicated region
    $region110: #{mpnn_forward.1} parent=1 // pred_check
      _
    $region111: #{mpnn_forward.1} parent=1 // pred_check_branch
      %206 = sbr.rel (0) target = $region113
    $region112: #{mpnn_forward.1} parent=1 // pred_region
      %207 = dma.done [#allocation11], 32
    $region113: #{mpnn_forward.1} parent=1 // pred_fallthru
      _
    // Predicated region
    $region114: #{mpnn_forward.1} parent=1 // pred_check
      _
    $region115: #{mpnn_forward.1} parent=1 // pred_check_branch
      %209 = sbr.rel (0) target = $region117
    $region116: #{mpnn_forward.1} parent=1 // pred_region
      %210 = dma.done [#allocation14], 2048
    $region117: #{mpnn_forward.1} parent=1 // pred_fallthru
      _
    // Predicated region
    $region118: #{mpnn_forward.1} parent=1 // pred_check
      _
    $region119: #{mpnn_forward.1} parent=1 // pred_check_branch
      %212 = sbr.rel (0) target = $region121
    $region120: #{mpnn_forward.1} parent=1 // pred_region
      %213 = dma.done [#allocation14], 1024
    $region121: #{mpnn_forward.1} parent=1 // pred_fallthru
      _
    // Predicated region
    $region122: #{mpnn_forward.1} parent=1 // pred_check
      _
    $region123: #{mpnn_forward.1} parent=1 // pred_check_branch
      %215 = sbr.rel (0) target = $region125
    $region124: #{mpnn_forward.1} parent=1 // pred_region
      %216 = dma.done [#allocation17], 16
    $region125: #{mpnn_forward.1} parent=1 // pred_fallthru
      _
    // Predicated region
    $region126: #{mpnn_forward.1} parent=1 // pred_check
      _
    $region127: #{mpnn_forward.1} parent=1 // pred_check_branch
      %218 = sbr.rel (0) target = $region129
    $region128: #{mpnn_forward.1} parent=1 // pred_region
      %219 = dma.done [#allocation17], 1024
    $region129: #{mpnn_forward.1} parent=1 // pred_fallthru
      _
    // Predicated region
    $region130: #{mpnn_forward.1} parent=1 // pred_check
      _
    $region131: #{mpnn_forward.1} parent=1 // pred_check_branch
      %221 = sbr.rel (0) target = $region133
    $region132: #{mpnn_forward.1} parent=1 // pred_region
      %222 = dma.done [#allocation20], 16
    $region133: #{mpnn_forward.1} parent=1 // pred_fallthru
      _
    %v224 = vlaneseq
    %v225 = vand.u32 %v224, 127
    %v226 = vld [vmem:[%s2] sm:$0xff]
    %v227 = vld [vmem:[%s2 + $0x8] sm:$0xff]
    %v228 = vld [vmem:[%s2 + $0x10] sm:$0xff]
    %v229 = vld [vmem:[%s2 + $0x18] sm:$0xff]
    %v230 = vld [vmem:[%s2 + $0x20] sm:$0xff]
    %v231 = vld [vmem:[%s2 + $0x28] sm:$0xff]
    %v232 = vld [vmem:[%s2 + $0x30] sm:$0xff]
    %v233 = vld [vmem:[%s2 + $0x38] sm:$0xff]
    %234 = vset.pattern.permute.xlu0 0
    %235 = vperm.xlu0 %234, %v226
    %v236 = vpop.permute.xlu0 %235
    %237 = vset.pattern.permute.xlu0 0
    %238 = vperm.xlu0 %237, %v227
    %v239 = vpop.permute.xlu0 %238
    %240 = vset.pattern.permute.xlu0 0
    %241 = vperm.xlu0 %240, %v228
    %v242 = vpop.permute.xlu0 %241
    %243 = vset.pattern.permute.xlu0 0
    %244 = vperm.xlu0 %243, %v229
    %v245 = vpop.permute.xlu0 %244
    %246 = vset.pattern.permute.xlu0 0
    %247 = vperm.xlu0 %246, %v230
    %v248 = vpop.permute.xlu0 %247
    %249 = vset.pattern.permute.xlu0 0
    %250 = vperm.xlu0 %249, %v231
    %v251 = vpop.permute.xlu0 %250
    %252 = vset.pattern.permute.xlu0 0
    %253 = vperm.xlu0 %252, %v232
    %v254 = vpop.permute.xlu0 %253
    %255 = vset.pattern.permute.xlu0 0
    %256 = vperm.xlu0 %255, %v233
    %v257 = vpop.permute.xlu0 %256
    %vm258 = vcmp.eq.s32.totalorder %v236, %v225
    %vm259 = vcmp.eq.s32.totalorder %v239, %v225
    %vm260 = vcmp.eq.s32.totalorder %v242, %v225
    %vm261 = vcmp.eq.s32.totalorder %v245, %v225
    %vm262 = vcmp.eq.s32.totalorder %v248, %v225
    %vm263 = vcmp.eq.s32.totalorder %v251, %v225
    %vm264 = vcmp.eq.s32.totalorder %v254, %v225
    %vm265 = vcmp.eq.s32.totalorder %v257, %v225
    %v266 = vsel %vm258, 1, 0
    %v267 = vsel %vm259, 1, 0
    %v268 = vsel %vm260, 1, 0
    %v269 = vsel %vm261, 1, 0
    %v270 = vsel %vm262, 1, 0
    %v271 = vsel %vm263, 1, 0
    %v272 = vsel %vm264, 1, 0
    %v273 = vsel %vm265, 1, 0
    %v274 = vcvt.s32.f32 %v266
    %v275 = vcvt.s32.f32 %v267
    %v276 = vcvt.s32.f32 %v268
    %v277 = vcvt.s32.f32 %v269
    %v278 = vcvt.s32.f32 %v270
    %v279 = vcvt.s32.f32 %v271
    %v280 = vcvt.s32.f32 %v272
    %v281 = vcvt.s32.f32 %v273
    %v282 = vpack.c.bf16 %v275, %v274
    %v283 = vpack.c.bf16 %v277, %v276
    %v284 = vpack.c.bf16 %v279, %v278
    %v285 = vpack.c.bf16 %v281, %v280
    %v286 = vlaneseq
    %v287 = vshrl.u32 %v286, 7
    %v288 = vadd.s32 %v287, 8
    %v289 = vld [vmem:[%s3] sm:$0x1]
    %v290 = vlaneseq
    %v291 = vshrl.u32 %v290, 7
    %v292 = vsub.s32 0, %v291
    %v293 = vrot.slane %v289, %v292
    %vm294 = vcmp.eq.s32.totalorder %v287, %v293
    %vm295 = vcmp.eq.s32.totalorder %v288, %v293
    %v296 = vsel %vm294, 1, 0
    %v297 = vsel %vm295, 1, 0
    %v298 = vcvt.s32.f32 %v296
    %v299 = vcvt.s32.f32 %v297
    %v300 = vpack.c.bf16 %v299, %v298
    %v301 = vld [vmem:[%s4] sm:$0x1]
    %v302 = vlaneseq
    %v303 = vshrl.u32 %v302, 7
    %v304 = vsub.s32 0, %v303
    %v305 = vrot.slane %v301, %v304
    %vm306 = vcmp.eq.s32.totalorder %v287, %v305
    %v307 = vsel %vm306, 1, 0
    %v308 = vcvt.s32.f32 %v307
    %v309 = vpack.c.bf16 %v308, %v308
    %v310 = vld [vmem:[%s0] sm:$0xff]
    %v311 = vld [vmem:[%s0 + $0x8] sm:$0xff]
    %v312 = vld [vmem:[#allocation2] sm:$0xf]
    %v313 = vld [vmem:[#allocation2 + $0x4] sm:$0xf]
    %v314 = vld [vmem:[#allocation2 + $0x8] sm:$0xf]
    %v315 = vld [vmem:[#allocation2 + $0xc] sm:$0xf]
    %v316 = vld [vmem:[#allocation2 + $0x10] sm:$0xf]
    %v317 = vld [vmem:[#allocation2 + $0x14] sm:$0xf]
    %v318 = vld [vmem:[#allocation2 + $0x18] sm:$0xf]
    %v319 = vld [vmem:[#allocation2 + $0x1c] sm:$0xf]
    %v320 = vld [vmem:[#allocation2 + $0x20] sm:$0xf]
    %v321 = vld [vmem:[#allocation2 + $0x24] sm:$0xf]
    %v322 = vld [vmem:[#allocation2 + $0x28] sm:$0xf]
    %v323 = vld [vmem:[#allocation2 + $0x2c] sm:$0xf]
    %v324 = vld [vmem:[#allocation2 + $0x30] sm:$0xf]
    %v325 = vld [vmem:[#allocation2 + $0x34] sm:$0xf]
    %v326 = vld [vmem:[#allocation2 + $0x38] sm:$0xf]
    %v327 = vld [vmem:[#allocation2 + $0x3c] sm:$0xf]
    %v328 = vpack.c.bf16 %v311, %v310
    %v329 = vld [vmem:[#allocation4] sm:$0x1]
    %v331 = vlaneseq
    %v332 = vshrl.u32 %v331, 7
    %v333 = vsub.s32 0, %v332
    %v334 = vrot.slane %v329, %v333
    %v352 = vunpack.c.l.b16 %v312
    %v353 = vunpack.c.l.b16 %v313
    %v354 = vunpack.c.l.b16 %v314
    %v355 = vunpack.c.l.b16 %v315
    %v356 = vunpack.c.l.b16 %v316
    %v357 = vunpack.c.l.b16 %v317
    %v358 = vunpack.c.l.b16 %v318
    %v359 = vunpack.c.l.b16 %v319
    %v360 = vunpack.c.l.b16 %v320
    %v361 = vunpack.c.l.b16 %v321
    %v362 = vunpack.c.l.b16 %v322
    %v363 = vunpack.c.l.b16 %v323
    %v364 = vunpack.c.l.b16 %v324
    %v365 = vunpack.c.l.b16 %v325
    %v366 = vunpack.c.l.b16 %v326
    %v367 = vunpack.c.l.b16 %v327
    %v368 = vpack.c.b16 %v353, %v352
    %v369 = vpack.c.b16 %v355, %v354
    %v370 = vpack.c.b16 %v357, %v356
    %v371 = vpack.c.b16 %v359, %v358
    %v372 = vpack.c.b16 %v361, %v360
    %v373 = vpack.c.b16 %v363, %v362
    %v374 = vpack.c.b16 %v365, %v364
    %v375 = vpack.c.b16 %v367, %v366
    %384 = vmatprep.subr.bf16.mxu0 0
    %385 = vmatpush1.bf16.msra.mxu0 %v368
    %386 = vmatprep.subr.bf16.mxu0 0
    %387 = vmatpush1.bf16.msra.mxu0 %v369
    %388 = vmatprep.subr.bf16.mxu0 0
    %389 = vmatpush1.bf16.msra.mxu0 %v370
    %390 = vmatprep.subr.bf16.mxu0 0
    %391 = vmatpush1.bf16.msra.mxu0 %v371
    %392 = vmatprep.subr.bf16.mxu0 0
    %393 = vmatpush1.bf16.msra.mxu0 %v372
    %394 = vmatprep.subr.bf16.mxu0 0
    %395 = vmatpush1.bf16.msra.mxu0 %v373
    %396 = vmatprep.subr.bf16.mxu0 0
    %397 = vmatpush1.bf16.msra.mxu0 %v374
    %398 = vmatprep.subr.bf16.mxu0 0
    %399 = vmatpush1.bf16.msra.mxu0 %v375
    %400 = vmatprep.subr.bf16.mxu0 0
    %401 = vmatpush1.bf16.msra.mxu0 0
    %402 = vmatprep.subr.bf16.mxu0 0
    %403 = vmatpush1.bf16.msra.mxu0 0
    %404 = vmatprep.subr.bf16.mxu0 0
    %405 = vmatpush1.bf16.msra.mxu0 0
    %406 = vmatprep.subr.bf16.mxu0 0
    %407 = vmatpush1.bf16.msra.mxu0 0
    %408 = vmatprep.subr.bf16.mxu0 0
    %409 = vmatpush1.bf16.msra.mxu0 0
    %410 = vmatprep.subr.bf16.mxu0 0
    %411 = vmatpush1.bf16.msra.mxu0 0
    %412 = vmatprep.subr.bf16.mxu0 0
    %413 = vmatpush1.bf16.msra.mxu0 0
    %414 = vmatprep.subr.bf16.mxu0 0
    %415 = vmatpush1.bf16.msra.mxu0 0
    %416 = vmatprep.mubr.bf16.mxu0 0
    %417 = vmatmul.mubr.bf16.gmra.mrb[0].mxu0 %v328
    %v418 = vpop.f32.mrb[0].mxu0
    %v419 = vadd.f32 %v334, %v418
    %v420 = vpop.f32.mrb[0].mxu0
    %v421 = vpop.f32.mrb[0].mxu0
    %v422 = vadd.f32 %v334, %v421
    %v423 = vpop.f32.mrb[0].mxu0
    %424 = vdwg.mxu0
    %v425 = vmax.f32 %v419, 0.0
    %v426 = vmax.f32 %v422, 0.0
    %v427 = vld [vmem:[#allocation6] sm:$0xf]
    %v428 = vld [vmem:[#allocation6 + $0x4] sm:$0xf]
    %v429 = vld [vmem:[#allocation6 + $0x8] sm:$0xf]
    %v430 = vld [vmem:[#allocation6 + $0xc] sm:$0xf]
    %v431 = vld [vmem:[#allocation6 + $0x10] sm:$0xf]
    %v432 = vld [vmem:[#allocation6 + $0x14] sm:$0xf]
    %v433 = vld [vmem:[#allocation6 + $0x18] sm:$0xf]
    %v434 = vld [vmem:[#allocation6 + $0x1c] sm:$0xf]
    %v435 = vld [vmem:[#allocation6 + $0x20] sm:$0xf]
    %v436 = vld [vmem:[#allocation6 + $0x24] sm:$0xf]
    %v437 = vld [vmem:[#allocation6 + $0x28] sm:$0xf]
    %v438 = vld [vmem:[#allocation6 + $0x2c] sm:$0xf]
    %v439 = vld [vmem:[#allocation6 + $0x30] sm:$0xf]
    %v440 = vld [vmem:[#allocation6 + $0x34] sm:$0xf]
    %v441 = vld [vmem:[#allocation6 + $0x38] sm:$0xf]
    %v442 = vld [vmem:[#allocation6 + $0x3c] sm:$0xf]
    %v443 = vpack.c.bf16 %v426, %v425
    %v444 = vld [vmem:[#allocation7] sm:$0x1]
    %v446 = vlaneseq
    %v447 = vshrl.u32 %v446, 7
    %v448 = vsub.s32 0, %v447
    %v449 = vrot.slane %v444, %v448
    %v467 = vunpack.c.l.b16 %v427
    %v468 = vunpack.c.l.b16 %v428
    %v469 = vunpack.c.l.b16 %v429
    %v470 = vunpack.c.l.b16 %v430
    %v471 = vunpack.c.l.b16 %v431
    %v472 = vunpack.c.l.b16 %v432
    %v473 = vunpack.c.l.b16 %v433
    %v474 = vunpack.c.l.b16 %v434
    %v475 = vunpack.c.l.b16 %v435
    %v476 = vunpack.c.l.b16 %v436
    %v477 = vunpack.c.l.b16 %v437
    %v478 = vunpack.c.l.b16 %v438
    %v479 = vunpack.c.l.b16 %v439
    %v480 = vunpack.c.l.b16 %v440
    %v481 = vunpack.c.l.b16 %v441
    %v482 = vunpack.c.l.b16 %v442
    %v483 = vpack.c.b16 %v468, %v467
    %v484 = vpack.c.b16 %v470, %v469
    %v485 = vpack.c.b16 %v472, %v471
    %v486 = vpack.c.b16 %v474, %v473
    %v487 = vpack.c.b16 %v476, %v475
    %v488 = vpack.c.b16 %v478, %v477
    %v489 = vpack.c.b16 %v480, %v479
    %v490 = vpack.c.b16 %v482, %v481
    %499 = vmatprep.subr.bf16.mxu0 0
    %500 = vmatpush1.bf16.msra.mxu0 %v483
    %501 = vmatprep.subr.bf16.mxu0 0
    %502 = vmatpush1.bf16.msra.mxu0 %v484
    %503 = vmatprep.subr.bf16.mxu0 0
    %504 = vmatpush1.bf16.msra.mxu0 %v485
    %505 = vmatprep.subr.bf16.mxu0 0
    %506 = vmatpush1.bf16.msra.mxu0 %v486
    %507 = vmatprep.subr.bf16.mxu0 0
    %508 = vmatpush1.bf16.msra.mxu0 %v487
    %509 = vmatprep.subr.bf16.mxu0 0
    %510 = vmatpush1.bf16.msra.mxu0 %v488
    %511 = vmatprep.subr.bf16.mxu0 0
    %512 = vmatpush1.bf16.msra.mxu0 %v489
    %513 = vmatprep.subr.bf16.mxu0 0
    %514 = vmatpush1.bf16.msra.mxu0 %v490
    %515 = vmatprep.subr.bf16.mxu0 0
    %516 = vmatpush1.bf16.msra.mxu0 0
    %517 = vmatprep.subr.bf16.mxu0 0
    %518 = vmatpush1.bf16.msra.mxu0 0
    %519 = vmatprep.subr.bf16.mxu0 0
    %520 = vmatpush1.bf16.msra.mxu0 0
    %521 = vmatprep.subr.bf16.mxu0 0
    %522 = vmatpush1.bf16.msra.mxu0 0
    %523 = vmatprep.subr.bf16.mxu0 0
    %524 = vmatpush1.bf16.msra.mxu0 0
    %525 = vmatprep.subr.bf16.mxu0 0
    %526 = vmatpush1.bf16.msra.mxu0 0
    %527 = vmatprep.subr.bf16.mxu0 0
    %528 = vmatpush1.bf16.msra.mxu0 0
    %529 = vmatprep.subr.bf16.mxu0 0
    %530 = vmatpush1.bf16.msra.mxu0 0
    %531 = vmatprep.mubr.bf16.mxu0 0
    %532 = vmatmul.mubr.bf16.gmra.mrb[0].mxu0 %v443
    %v533 = vpop.f32.mrb[0].mxu0
    %v534 = vadd.f32 %v449, %v533
    %v535 = vpop.f32.mrb[0].mxu0
    %v536 = vpop.f32.mrb[0].mxu0
    %v537 = vadd.f32 %v449, %v536
    %v538 = vpop.f32.mrb[0].mxu0
    %539 = vdwg.mxu0
    %v540 = vld [vmem:[%s1] sm:$0xff]
    %v541 = vld [vmem:[%s1 + $0x8] sm:$0xff]
    %v542 = vld [vmem:[%s1 + $0x10] sm:$0xff]
    %v543 = vld [vmem:[%s1 + $0x18] sm:$0xff]
    %v544 = vpack.c.bf16 %v537, %v534
    %vm545 = vcmask 130048
    %v547 = vsel %vm545, %v282, 0
    %v550 = vsel %vm545, %v283, 0
    %v553 = vsel %vm545, %v284, 0
    %v556 = vsel %vm545, %v285, 0
    %558 = vmatprep.subr.bf16.mxu0 0
    %559 = vmatpush1.bf16.msra.mxu0 %v544
    %560 = vmatprep.subr.bf16.mxu0 0
    %561 = vmatpush1.bf16.msra.mxu0 0
    %562 = vmatprep.subr.bf16.mxu0 0
    %563 = vmatpush1.bf16.msra.mxu0 0
    %564 = vmatprep.subr.bf16.mxu0 0
    %565 = vmatpush1.bf16.msra.mxu0 0
    %566 = vmatprep.subr.bf16.mxu0 0
    %567 = vmatpush1.bf16.msra.mxu0 0
    %568 = vmatprep.subr.bf16.mxu0 0
    %569 = vmatpush1.bf16.msra.mxu0 0
    %570 = vmatprep.subr.bf16.mxu0 0
    %571 = vmatpush1.bf16.msra.mxu0 0
    %572 = vmatprep.subr.bf16.mxu0 0
    %573 = vmatpush1.bf16.msra.mxu0 0
    %574 = vmatprep.subr.bf16.mxu0 0
    %575 = vmatpush1.bf16.msra.mxu0 0
    %576 = vmatprep.subr.bf16.mxu0 0
    %577 = vmatpush1.bf16.msra.mxu0 0
    %578 = vmatprep.subr.bf16.mxu0 0
    %579 = vmatpush1.bf16.msra.mxu0 0
    %580 = vmatprep.subr.bf16.mxu0 0
    %581 = vmatpush1.bf16.msra.mxu0 0
    %582 = vmatprep.subr.bf16.mxu0 0
    %583 = vmatpush1.bf16.msra.mxu0 0
    %584 = vmatprep.subr.bf16.mxu0 0
    %585 = vmatpush1.bf16.msra.mxu0 0
    %586 = vmatprep.subr.bf16.mxu0 0
    %587 = vmatpush1.bf16.msra.mxu0 0
    %588 = vmatprep.subr.bf16.mxu0 0
    %589 = vmatpush1.bf16.msra.mxu0 0
    %590 = vmatprep.mubr.bf16.mxu0 0
    %591 = vmatmul.mubr.bf16.gmra.mrb[0].mxu0 %v547
    %v592 = vpop.f32.mrb[0].mxu0
    %v593 = vadd.f32 0.0, %v592
    %v594 = vpop.f32.mrb[0].mxu0
    %v595 = vpop.f32.mrb[0].mxu0
    %v596 = vadd.f32 0.0, %v595
    %v597 = vpop.f32.mrb[0].mxu0
    %598 = vmatprep.mubr.bf16.mxu0 0
    %599 = vmatmul.mubr.bf16.gmra.mrb[0].mxu0 %v550
    %v600 = vpop.f32.mrb[0].mxu0
    %v601 = vadd.f32 0.0, %v600
    %v602 = vpop.f32.mrb[0].mxu0
    %v603 = vpop.f32.mrb[0].mxu0
    %v604 = vadd.f32 0.0, %v603
    %v605 = vpop.f32.mrb[0].mxu0
    %606 = vmatprep.mubr.bf16.mxu0 0
    %607 = vmatmul.mubr.bf16.gmra.mrb[0].mxu0 %v553
    %v608 = vpop.f32.mrb[0].mxu0
    %v609 = vadd.f32 0.0, %v608
    %v610 = vpop.f32.mrb[0].mxu0
    %v611 = vpop.f32.mrb[0].mxu0
    %v612 = vadd.f32 0.0, %v611
    %v613 = vpop.f32.mrb[0].mxu0
    %614 = vmatprep.mubr.bf16.mxu0 0
    %615 = vmatmul.mubr.bf16.gmra.mrb[0].mxu0 %v556
    %v616 = vpop.f32.mrb[0].mxu0
    %v617 = vadd.f32 0.0, %v616
    %v618 = vpop.f32.mrb[0].mxu0
    %v619 = vpop.f32.mrb[0].mxu0
    %v620 = vadd.f32 0.0, %v619
    %v621 = vpop.f32.mrb[0].mxu0
    %622 = vdwg.mxu0
    %623 = vrot.lane.b32.xlu0 %v609, 32
    %v624 = vpop.permute.xlu0 %623
    %625 = vrot.lane.b32.xlu0 %v612, 32
    %v626 = vpop.permute.xlu0 %625
    %627 = vrot.lane.b32.xlu0 %v617, 32
    %v628 = vpop.permute.xlu0 %627
    %629 = vrot.lane.b32.xlu0 %v620, 32
    %v630 = vpop.permute.xlu0 %629
    %v631 = vadd.f32 %v593, %v624
    %v632 = vadd.f32 %v596, %v626
    %v633 = vadd.f32 %v601, %v628
    %v634 = vadd.f32 %v604, %v630
    %v635 = vadd.f32 %v631, %v540
    %v636 = vadd.f32 %v632, %v541
    %v637 = vadd.f32 %v633, %v542
    %v638 = vadd.f32 %v634, %v543
    %v639 = vld [vmem:[%s9] sm:$0xf]
    %v640 = vld [vmem:[%s9 + $0x4] sm:$0xf]
    %v641 = vld [vmem:[%s9 + $0x8] sm:$0xf]
    %v642 = vld [vmem:[%s9 + $0xc] sm:$0xf]
    %v643 = vld [vmem:[%s9 + $0x10] sm:$0xf]
    %v644 = vld [vmem:[%s9 + $0x14] sm:$0xf]
    %v645 = vld [vmem:[%s9 + $0x18] sm:$0xf]
    %v646 = vld [vmem:[%s9 + $0x1c] sm:$0xf]
    %v647 = vld [vmem:[%s9 + $0x20] sm:$0xf]
    %v648 = vld [vmem:[%s9 + $0x24] sm:$0xf]
    %v649 = vld [vmem:[%s9 + $0x28] sm:$0xf]
    %v650 = vld [vmem:[%s9 + $0x2c] sm:$0xf]
    %v651 = vld [vmem:[%s9 + $0x30] sm:$0xf]
    %v652 = vld [vmem:[%s9 + $0x34] sm:$0xf]
    %v653 = vld [vmem:[%s9 + $0x38] sm:$0xf]
    %v654 = vld [vmem:[%s9 + $0x3c] sm:$0xf]
    %v655 = vpack.c.bf16 %v636, %v635
    %v656 = vpack.c.bf16 %v638, %v637
    %v657 = vld [vmem:[#allocation9] sm:$0x1]
    %v659 = vlaneseq
    %v660 = vshrl.u32 %v659, 7
    %v661 = vsub.s32 0, %v660
    %v662 = vrot.slane %v657, %v661
    %v680 = vunpack.c.l.b16 %v639
    %v681 = vunpack.c.l.b16 %v640
    %v682 = vunpack.c.l.b16 %v641
    %v683 = vunpack.c.l.b16 %v642
    %v684 = vunpack.c.l.b16 %v643
    %v685 = vunpack.c.l.b16 %v644
    %v686 = vunpack.c.l.b16 %v645
    %v687 = vunpack.c.l.b16 %v646
    %v688 = vunpack.c.l.b16 %v647
    %v689 = vunpack.c.l.b16 %v648
    %v690 = vunpack.c.l.b16 %v649
    %v691 = vunpack.c.l.b16 %v650
    %v692 = vunpack.c.l.b16 %v651
    %v693 = vunpack.c.l.b16 %v652
    %v694 = vunpack.c.l.b16 %v653
    %v695 = vunpack.c.l.b16 %v654
    %v696 = vpack.c.b16 %v681, %v680
    %v697 = vpack.c.b16 %v683, %v682
    %v698 = vpack.c.b16 %v685, %v684
    %v699 = vpack.c.b16 %v687, %v686
    %v700 = vpack.c.b16 %v689, %v688
    %v701 = vpack.c.b16 %v691, %v690
    %v702 = vpack.c.b16 %v693, %v692
    %v703 = vpack.c.b16 %v695, %v694
    %712 = vmatprep.subr.bf16.mxu0 0
    %713 = vmatpush1.bf16.msra.mxu0 %v696
    %714 = vmatprep.subr.bf16.mxu0 0
    %715 = vmatpush1.bf16.msra.mxu0 %v697
    %716 = vmatprep.subr.bf16.mxu0 0
    %717 = vmatpush1.bf16.msra.mxu0 %v698
    %718 = vmatprep.subr.bf16.mxu0 0
    %719 = vmatpush1.bf16.msra.mxu0 %v699
    %720 = vmatprep.subr.bf16.mxu0 0
    %721 = vmatpush1.bf16.msra.mxu0 %v700
    %722 = vmatprep.subr.bf16.mxu0 0
    %723 = vmatpush1.bf16.msra.mxu0 %v701
    %724 = vmatprep.subr.bf16.mxu0 0
    %725 = vmatpush1.bf16.msra.mxu0 %v702
    %726 = vmatprep.subr.bf16.mxu0 0
    %727 = vmatpush1.bf16.msra.mxu0 %v703
    %728 = vmatprep.subr.bf16.mxu0 0
    %729 = vmatpush1.bf16.msra.mxu0 0
    %730 = vmatprep.subr.bf16.mxu0 0
    %731 = vmatpush1.bf16.msra.mxu0 0
    %732 = vmatprep.subr.bf16.mxu0 0
    %733 = vmatpush1.bf16.msra.mxu0 0
    %734 = vmatprep.subr.bf16.mxu0 0
    %735 = vmatpush1.bf16.msra.mxu0 0
    %736 = vmatprep.subr.bf16.mxu0 0
    %737 = vmatpush1.bf16.msra.mxu0 0
    %738 = vmatprep.subr.bf16.mxu0 0
    %739 = vmatpush1.bf16.msra.mxu0 0
    %740 = vmatprep.subr.bf16.mxu0 0
    %741 = vmatpush1.bf16.msra.mxu0 0
    %742 = vmatprep.subr.bf16.mxu0 0
    %743 = vmatpush1.bf16.msra.mxu0 0
    %744 = vmatprep.mubr.bf16.mxu0 0
    %745 = vmatmul.mubr.bf16.gmra.mrb[0].mxu0 %v655
    %v746 = vpop.f32.mrb[0].mxu0
    %v747 = vadd.f32 %v662, %v746
    %v748 = vpop.f32.mrb[0].mxu0
    %v749 = vpop.f32.mrb[0].mxu0
    %v750 = vadd.f32 %v662, %v749
    %v751 = vpop.f32.mrb[0].mxu0
    %752 = vmatprep.mubr.bf16.mxu0 0
    %753 = vmatmul.mubr.bf16.gmra.mrb[0].mxu0 %v656
    %v754 = vpop.f32.mrb[0].mxu0
    %v755 = vadd.f32 %v662, %v754
    %v756 = vpop.f32.mrb[0].mxu0
    %v757 = vpop.f32.mrb[0].mxu0
    %v758 = vadd.f32 %v662, %v757
    %v759 = vpop.f32.mrb[0].mxu0
    %760 = vdwg.mxu0
    %v761 = vmax.f32 %v747, 0.0
    %v762 = vmax.f32 %v750, 0.0
    %v763 = vmax.f32 %v755, 0.0
    %v764 = vmax.f32 %v758, 0.0
    %v765 = vld [vmem:[%s11] sm:$0xf]
    %v766 = vld [vmem:[%s11 + $0x4] sm:$0xf]
    %v767 = vld [vmem:[%s11 + $0x8] sm:$0xf]
    %v768 = vld [vmem:[%s11 + $0xc] sm:$0xf]
    %v769 = vld [vmem:[%s11 + $0x10] sm:$0xf]
    %v770 = vld [vmem:[%s11 + $0x14] sm:$0xf]
    %v771 = vld [vmem:[%s11 + $0x18] sm:$0xf]
    %v772 = vld [vmem:[%s11 + $0x1c] sm:$0xf]
    %v773 = vld [vmem:[%s11 + $0x20] sm:$0xf]
    %v774 = vld [vmem:[%s11 + $0x24] sm:$0xf]
    %v775 = vld [vmem:[%s11 + $0x28] sm:$0xf]
    %v776 = vld [vmem:[%s11 + $0x2c] sm:$0xf]
    %v777 = vld [vmem:[%s11 + $0x30] sm:$0xf]
    %v778 = vld [vmem:[%s11 + $0x34] sm:$0xf]
    %v779 = vld [vmem:[%s11 + $0x38] sm:$0xf]
    %v780 = vld [vmem:[%s11 + $0x3c] sm:$0xf]
    %v781 = vpack.c.bf16 %v762, %v761
    %v782 = vpack.c.bf16 %v764, %v763
    %v783 = vld [vmem:[#allocation10] sm:$0x1]
    %v785 = vlaneseq
    %v786 = vshrl.u32 %v785, 7
    %v787 = vsub.s32 0, %v786
    %v788 = vrot.slane %v783, %v787
    %v806 = vunpack.c.l.b16 %v765
    %v807 = vunpack.c.l.b16 %v766
    %v808 = vunpack.c.l.b16 %v767
    %v809 = vunpack.c.l.b16 %v768
    %v810 = vunpack.c.l.b16 %v769
    %v811 = vunpack.c.l.b16 %v770
    %v812 = vunpack.c.l.b16 %v771
    %v813 = vunpack.c.l.b16 %v772
    %v814 = vunpack.c.l.b16 %v773
    %v815 = vunpack.c.l.b16 %v774
    %v816 = vunpack.c.l.b16 %v775
    %v817 = vunpack.c.l.b16 %v776
    %v818 = vunpack.c.l.b16 %v777
    %v819 = vunpack.c.l.b16 %v778
    %v820 = vunpack.c.l.b16 %v779
    %v821 = vunpack.c.l.b16 %v780
    %v822 = vpack.c.b16 %v807, %v806
    %v823 = vpack.c.b16 %v809, %v808
    %v824 = vpack.c.b16 %v811, %v810
    %v825 = vpack.c.b16 %v813, %v812
    %v826 = vpack.c.b16 %v815, %v814
    %v827 = vpack.c.b16 %v817, %v816
    %v828 = vpack.c.b16 %v819, %v818
    %v829 = vpack.c.b16 %v821, %v820
    %838 = vmatprep.subr.bf16.mxu0 0
    %839 = vmatpush1.bf16.msra.mxu0 %v822
    %840 = vmatprep.subr.bf16.mxu0 0
    %841 = vmatpush1.bf16.msra.mxu0 %v823
    %842 = vmatprep.subr.bf16.mxu0 0
    %843 = vmatpush1.bf16.msra.mxu0 %v824
    %844 = vmatprep.subr.bf16.mxu0 0
    %845 = vmatpush1.bf16.msra.mxu0 %v825
    %846 = vmatprep.subr.bf16.mxu0 0
    %847 = vmatpush1.bf16.msra.mxu0 %v826
    %848 = vmatprep.subr.bf16.mxu0 0
    %849 = vmatpush1.bf16.msra.mxu0 %v827
    %850 = vmatprep.subr.bf16.mxu0 0
    %851 = vmatpush1.bf16.msra.mxu0 %v828
    %852 = vmatprep.subr.bf16.mxu0 0
    %853 = vmatpush1.bf16.msra.mxu0 %v829
    %854 = vmatprep.subr.bf16.mxu0 0
    %855 = vmatpush1.bf16.msra.mxu0 0
    %856 = vmatprep.subr.bf16.mxu0 0
    %857 = vmatpush1.bf16.msra.mxu0 0
    %858 = vmatprep.subr.bf16.mxu0 0
    %859 = vmatpush1.bf16.msra.mxu0 0
    %860 = vmatprep.subr.bf16.mxu0 0
    %861 = vmatpush1.bf16.msra.mxu0 0
    %862 = vmatprep.subr.bf16.mxu0 0
    %863 = vmatpush1.bf16.msra.mxu0 0
    %864 = vmatprep.subr.bf16.mxu0 0
    %865 = vmatpush1.bf16.msra.mxu0 0
    %866 = vmatprep.subr.bf16.mxu0 0
    %867 = vmatpush1.bf16.msra.mxu0 0
    %868 = vmatprep.subr.bf16.mxu0 0
    %869 = vmatpush1.bf16.msra.mxu0 0
    %870 = vmatprep.mubr.bf16.mxu0 0
    %871 = vmatmul.mubr.bf16.gmra.mrb[0].mxu0 %v781
    %v872 = vpop.f32.mrb[0].mxu0
    %v873 = vadd.f32 %v788, %v872
    %v874 = vpop.f32.mrb[0].mxu0
    %v875 = vpop.f32.mrb[0].mxu0
    %v876 = vadd.f32 %v788, %v875
    %v877 = vpop.f32.mrb[0].mxu0
    %878 = vmatprep.mubr.bf16.mxu0 0
    %879 = vmatmul.mubr.bf16.gmra.mrb[0].mxu0 %v782
    %v880 = vpop.f32.mrb[0].mxu0
    %v881 = vadd.f32 %v788, %v880
    %v882 = vpop.f32.mrb[0].mxu0
    %v883 = vpop.f32.mrb[0].mxu0
    %v884 = vadd.f32 %v788, %v883
    %v885 = vpop.f32.mrb[0].mxu0
    %886 = vdwg.mxu0
    %v887 = vpack.c.bf16 %v876, %v873
    %v888 = vpack.c.bf16 %v884, %v881
    %vm889 = vcmask 261120
    %v891 = vsel %vm889, %v300, 0
    %893 = vmatprep.subr.bf16.mxu0 0
    %894 = vmatpush1.bf16.msra.mxu0 %v887
    %895 = vmatprep.subr.bf16.mxu0 0
    %896 = vmatpush1.bf16.msra.mxu0 %v888
    %897 = vmatprep.subr.bf16.mxu0 0
    %898 = vmatpush1.bf16.msra.mxu0 0
    %899 = vmatprep.subr.bf16.mxu0 0
    %900 = vmatpush1.bf16.msra.mxu0 0
    %901 = vmatprep.subr.bf16.mxu0 0
    %902 = vmatpush1.bf16.msra.mxu0 0
    %903 = vmatprep.subr.bf16.mxu0 0
    %904 = vmatpush1.bf16.msra.mxu0 0
    %905 = vmatprep.subr.bf16.mxu0 0
    %906 = vmatpush1.bf16.msra.mxu0 0
    %907 = vmatprep.subr.bf16.mxu0 0
    %908 = vmatpush1.bf16.msra.mxu0 0
    %909 = vmatprep.subr.bf16.mxu0 0
    %910 = vmatpush1.bf16.msra.mxu0 0
    %911 = vmatprep.subr.bf16.mxu0 0
    %912 = vmatpush1.bf16.msra.mxu0 0
    %913 = vmatprep.subr.bf16.mxu0 0
    %914 = vmatpush1.bf16.msra.mxu0 0
    %915 = vmatprep.subr.bf16.mxu0 0
    %916 = vmatpush1.bf16.msra.mxu0 0
    %917 = vmatprep.subr.bf16.mxu0 0
    %918 = vmatpush1.bf16.msra.mxu0 0
    %919 = vmatprep.subr.bf16.mxu0 0
    %920 = vmatpush1.bf16.msra.mxu0 0
    %921 = vmatprep.subr.bf16.mxu0 0
    %922 = vmatpush1.bf16.msra.mxu0 0
    %923 = vmatprep.subr.bf16.mxu0 0
    %924 = vmatpush1.bf16.msra.mxu0 0
    %925 = vmatprep.mubr.bf16.mxu0 0
    %926 = vmatmul.mubr.bf16.gmra.mrb[0].mxu0 %v891
    %v927 = vpop.f32.mrb[0].mxu0
    %v928 = vadd.f32 0.0, %v927
    %v929 = vpop.f32.mrb[0].mxu0
    %v930 = vpop.f32.mrb[0].mxu0
    %v931 = vadd.f32 0.0, %v930
    %v932 = vpop.f32.mrb[0].mxu0
    %933 = vdwg.mxu0
    %934 = vrot.lane.b32.xlu0 %v928, 32
    %v935 = vpop.permute.xlu0 %934
    %936 = vrot.lane.b32.xlu0 %v931, 32
    %v937 = vpop.permute.xlu0 %936
    %v938 = vadd.f32 %v534, %v935
    %v939 = vadd.f32 %v537, %v937
    %v940 = vld [vmem:[%s13] sm:$0xf]
    %v941 = vld [vmem:[%s13 + $0x4] sm:$0xf]
    %v942 = vld [vmem:[%s13 + $0x8] sm:$0xf]
    %v943 = vld [vmem:[%s13 + $0xc] sm:$0xf]
    %v944 = vld [vmem:[%s13 + $0x10] sm:$0xf]
    %v945 = vld [vmem:[%s13 + $0x14] sm:$0xf]
    %v946 = vld [vmem:[%s13 + $0x18] sm:$0xf]
    %v947 = vld [vmem:[%s13 + $0x1c] sm:$0xf]
    %v948 = vld [vmem:[%s13 + $0x20] sm:$0xf]
    %v949 = vld [vmem:[%s13 + $0x24] sm:$0xf]
    %v950 = vld [vmem:[%s13 + $0x28] sm:$0xf]
    %v951 = vld [vmem:[%s13 + $0x2c] sm:$0xf]
    %v952 = vld [vmem:[%s13 + $0x30] sm:$0xf]
    %v953 = vld [vmem:[%s13 + $0x34] sm:$0xf]
    %v954 = vld [vmem:[%s13 + $0x38] sm:$0xf]
    %v955 = vld [vmem:[%s13 + $0x3c] sm:$0xf]
    %v956 = vpack.c.bf16 %v939, %v938
    %v957 = vld [vmem:[#allocation12] sm:$0x1]
    %v959 = vlaneseq
    %v960 = vshrl.u32 %v959, 7
    %v961 = vsub.s32 0, %v960
    %v962 = vrot.slane %v957, %v961
    %v980 = vunpack.c.l.b16 %v940
    %v981 = vunpack.c.l.b16 %v941
    %v982 = vunpack.c.l.b16 %v942
    %v983 = vunpack.c.l.b16 %v943
    %v984 = vunpack.c.l.b16 %v944
    %v985 = vunpack.c.l.b16 %v945
    %v986 = vunpack.c.l.b16 %v946
    %v987 = vunpack.c.l.b16 %v947
    %v988 = vunpack.c.l.b16 %v948
    %v989 = vunpack.c.l.b16 %v949
    %v990 = vunpack.c.l.b16 %v950
    %v991 = vunpack.c.l.b16 %v951
    %v992 = vunpack.c.l.b16 %v952
    %v993 = vunpack.c.l.b16 %v953
    %v994 = vunpack.c.l.b16 %v954
    %v995 = vunpack.c.l.b16 %v955
    %v996 = vpack.c.b16 %v981, %v980
    %v997 = vpack.c.b16 %v983, %v982
    %v998 = vpack.c.b16 %v985, %v984
    %v999 = vpack.c.b16 %v987, %v986
    %v1000 = vpack.c.b16 %v989, %v988
    %v1001 = vpack.c.b16 %v991, %v990
    %v1002 = vpack.c.b16 %v993, %v992
    %v1003 = vpack.c.b16 %v995, %v994
    %1012 = vmatprep.subr.bf16.mxu0 0
    %1013 = vmatpush1.bf16.msra.mxu0 %v996
    %1014 = vmatprep.subr.bf16.mxu0 0
    %1015 = vmatpush1.bf16.msra.mxu0 %v997
    %1016 = vmatprep.subr.bf16.mxu0 0
    %1017 = vmatpush1.bf16.msra.mxu0 %v998
    %1018 = vmatprep.subr.bf16.mxu0 0
    %1019 = vmatpush1.bf16.msra.mxu0 %v999
    %1020 = vmatprep.subr.bf16.mxu0 0
    %1021 = vmatpush1.bf16.msra.mxu0 %v1000
    %1022 = vmatprep.subr.bf16.mxu0 0
    %1023 = vmatpush1.bf16.msra.mxu0 %v1001
    %1024 = vmatprep.subr.bf16.mxu0 0
    %1025 = vmatpush1.bf16.msra.mxu0 %v1002
    %1026 = vmatprep.subr.bf16.mxu0 0
    %1027 = vmatpush1.bf16.msra.mxu0 %v1003
    %1028 = vmatprep.subr.bf16.mxu0 0
    %1029 = vmatpush1.bf16.msra.mxu0 0
    %1030 = vmatprep.subr.bf16.mxu0 0
    %1031 = vmatpush1.bf16.msra.mxu0 0
    %1032 = vmatprep.subr.bf16.mxu0 0
    %1033 = vmatpush1.bf16.msra.mxu0 0
    %1034 = vmatprep.subr.bf16.mxu0 0
    %1035 = vmatpush1.bf16.msra.mxu0 0
    %1036 = vmatprep.subr.bf16.mxu0 0
    %1037 = vmatpush1.bf16.msra.mxu0 0
    %1038 = vmatprep.subr.bf16.mxu0 0
    %1039 = vmatpush1.bf16.msra.mxu0 0
    %1040 = vmatprep.subr.bf16.mxu0 0
    %1041 = vmatpush1.bf16.msra.mxu0 0
    %1042 = vmatprep.subr.bf16.mxu0 0
    %1043 = vmatpush1.bf16.msra.mxu0 0
    %1044 = vmatprep.mubr.bf16.mxu0 0
    %1045 = vmatmul.mubr.bf16.gmra.mrb[0].mxu0 %v956
    %v1046 = vpop.f32.mrb[0].mxu0
    %v1047 = vadd.f32 %v962, %v1046
    %v1048 = vpop.f32.mrb[0].mxu0
    %v1049 = vpop.f32.mrb[0].mxu0
    %v1050 = vadd.f32 %v962, %v1049
    %v1051 = vpop.f32.mrb[0].mxu0
    %1052 = vdwg.mxu0
    %v1053 = vmax.f32 %v1047, 0.0
    %v1054 = vmax.f32 %v1050, 0.0
    %v1055 = vld [vmem:[#allocation13] sm:$0xf]
    %v1056 = vld [vmem:[#allocation13 + $0x4] sm:$0xf]
    %v1057 = vld [vmem:[#allocation13 + $0x8] sm:$0xf]
    %v1058 = vld [vmem:[#allocation13 + $0xc] sm:$0xf]
    %v1059 = vld [vmem:[#allocation13 + $0x10] sm:$0xf]
    %v1060 = vld [vmem:[#allocation13 + $0x14] sm:$0xf]
    %v1061 = vld [vmem:[#allocation13 + $0x18] sm:$0xf]
    %v1062 = vld [vmem:[#allocation13 + $0x1c] sm:$0xf]
    %v1063 = vld [vmem:[#allocation13 + $0x20] sm:$0xf]
    %v1064 = vld [vmem:[#allocation13 + $0x24] sm:$0xf]
    %v1065 = vld [vmem:[#allocation13 + $0x28] sm:$0xf]
    %v1066 = vld [vmem:[#allocation13 + $0x2c] sm:$0xf]
    %v1067 = vld [vmem:[#allocation13 + $0x30] sm:$0xf]
    %v1068 = vld [vmem:[#allocation13 + $0x34] sm:$0xf]
    %v1069 = vld [vmem:[#allocation13 + $0x38] sm:$0xf]
    %v1070 = vld [vmem:[#allocation13 + $0x3c] sm:$0xf]
    %v1071 = vpack.c.bf16 %v1054, %v1053
    %v1072 = vld [vmem:[%s16] sm:$0x1]
    %v1074 = vlaneseq
    %v1075 = vshrl.u32 %v1074, 7
    %v1076 = vsub.s32 0, %v1075
    %v1077 = vrot.slane %v1072, %v1076
    %v1095 = vunpack.c.l.b16 %v1055
    %v1096 = vunpack.c.l.b16 %v1056
    %v1097 = vunpack.c.l.b16 %v1057
    %v1098 = vunpack.c.l.b16 %v1058
    %v1099 = vunpack.c.l.b16 %v1059
    %v1100 = vunpack.c.l.b16 %v1060
    %v1101 = vunpack.c.l.b16 %v1061
    %v1102 = vunpack.c.l.b16 %v1062
    %v1103 = vunpack.c.l.b16 %v1063
    %v1104 = vunpack.c.l.b16 %v1064
    %v1105 = vunpack.c.l.b16 %v1065
    %v1106 = vunpack.c.l.b16 %v1066
    %v1107 = vunpack.c.l.b16 %v1067
    %v1108 = vunpack.c.l.b16 %v1068
    %v1109 = vunpack.c.l.b16 %v1069
    %v1110 = vunpack.c.l.b16 %v1070
    %v1111 = vpack.c.b16 %v1096, %v1095
    %v1112 = vpack.c.b16 %v1098, %v1097
    %v1113 = vpack.c.b16 %v1100, %v1099
    %v1114 = vpack.c.b16 %v1102, %v1101
    %v1115 = vpack.c.b16 %v1104, %v1103
    %v1116 = vpack.c.b16 %v1106, %v1105
    %v1117 = vpack.c.b16 %v1108, %v1107
    %v1118 = vpack.c.b16 %v1110, %v1109
    %1127 = vmatprep.subr.bf16.mxu0 0
    %1128 = vmatpush1.bf16.msra.mxu0 %v1111
    %1129 = vmatprep.subr.bf16.mxu0 0
    %1130 = vmatpush1.bf16.msra.mxu0 %v1112
    %1131 = vmatprep.subr.bf16.mxu0 0
    %1132 = vmatpush1.bf16.msra.mxu0 %v1113
    %1133 = vmatprep.subr.bf16.mxu0 0
    %1134 = vmatpush1.bf16.msra.mxu0 %v1114
    %1135 = vmatprep.subr.bf16.mxu0 0
    %1136 = vmatpush1.bf16.msra.mxu0 %v1115
    %1137 = vmatprep.subr.bf16.mxu0 0
    %1138 = vmatpush1.bf16.msra.mxu0 %v1116
    %1139 = vmatprep.subr.bf16.mxu0 0
    %1140 = vmatpush1.bf16.msra.mxu0 %v1117
    %1141 = vmatprep.subr.bf16.mxu0 0
    %1142 = vmatpush1.bf16.msra.mxu0 %v1118
    %1143 = vmatprep.subr.bf16.mxu0 0
    %1144 = vmatpush1.bf16.msra.mxu0 0
    %1145 = vmatprep.subr.bf16.mxu0 0
    %1146 = vmatpush1.bf16.msra.mxu0 0
    %1147 = vmatprep.subr.bf16.mxu0 0
    %1148 = vmatpush1.bf16.msra.mxu0 0
    %1149 = vmatprep.subr.bf16.mxu0 0
    %1150 = vmatpush1.bf16.msra.mxu0 0
    %1151 = vmatprep.subr.bf16.mxu0 0
    %1152 = vmatpush1.bf16.msra.mxu0 0
    %1153 = vmatprep.subr.bf16.mxu0 0
    %1154 = vmatpush1.bf16.msra.mxu0 0
    %1155 = vmatprep.subr.bf16.mxu0 0
    %1156 = vmatpush1.bf16.msra.mxu0 0
    %1157 = vmatprep.subr.bf16.mxu0 0
    %1158 = vmatpush1.bf16.msra.mxu0 0
    %1159 = vmatprep.mubr.bf16.mxu0 0
    %1160 = vmatmul.mubr.bf16.gmra.mrb[0].mxu0 %v1071
    %v1161 = vpop.f32.mrb[0].mxu0
    %v1162 = vadd.f32 %v1077, %v1161
    %v1163 = vpop.f32.mrb[0].mxu0
    %v1164 = vpop.f32.mrb[0].mxu0
    %v1165 = vadd.f32 %v1077, %v1164
    %v1166 = vpop.f32.mrb[0].mxu0
    %1167 = vdwg.mxu0
    %v1168 = vpack.c.bf16 %v1165, %v1162
    %1169 = vmatprep.subr.bf16.mxu0 0
    %1170 = vmatpush1.bf16.msra.mxu0 %v1168
    %1171 = vmatprep.subr.bf16.mxu0 0
    %1172 = vmatpush1.bf16.msra.mxu0 0
    %1173 = vmatprep.subr.bf16.mxu0 0
    %1174 = vmatpush1.bf16.msra.mxu0 0
    %1175 = vmatprep.subr.bf16.mxu0 0
    %1176 = vmatpush1.bf16.msra.mxu0 0
    %1177 = vmatprep.subr.bf16.mxu0 0
    %1178 = vmatpush1.bf16.msra.mxu0 0
    %1179 = vmatprep.subr.bf16.mxu0 0
    %1180 = vmatpush1.bf16.msra.mxu0 0
    %1181 = vmatprep.subr.bf16.mxu0 0
    %1182 = vmatpush1.bf16.msra.mxu0 0
    %1183 = vmatprep.subr.bf16.mxu0 0
    %1184 = vmatpush1.bf16.msra.mxu0 0
    %1185 = vmatprep.subr.bf16.mxu0 0
    %1186 = vmatpush1.bf16.msra.mxu0 0
    %1187 = vmatprep.subr.bf16.mxu0 0
    %1188 = vmatpush1.bf16.msra.mxu0 0
    %1189 = vmatprep.subr.bf16.mxu0 0
    %1190 = vmatpush1.bf16.msra.mxu0 0
    %1191 = vmatprep.subr.bf16.mxu0 0
    %1192 = vmatpush1.bf16.msra.mxu0 0
    %1193 = vmatprep.subr.bf16.mxu0 0
    %1194 = vmatpush1.bf16.msra.mxu0 0
    %1195 = vmatprep.subr.bf16.mxu0 0
    %1196 = vmatpush1.bf16.msra.mxu0 0
    %1197 = vmatprep.subr.bf16.mxu0 0
    %1198 = vmatpush1.bf16.msra.mxu0 0
    %1199 = vmatprep.subr.bf16.mxu0 0
    %1200 = vmatpush1.bf16.msra.mxu0 0
    %1201 = vmatprep.mubr.bf16.mxu0 0
    %1202 = vmatmul.mubr.bf16.gmra.mrb[0].mxu0 %v547
    %v1203 = vpop.f32.mrb[0].mxu0
    %v1204 = vadd.f32 0.0, %v1203
    %v1205 = vpop.f32.mrb[0].mxu0
    %v1206 = vpop.f32.mrb[0].mxu0
    %v1207 = vadd.f32 0.0, %v1206
    %v1208 = vpop.f32.mrb[0].mxu0
    %1209 = vmatprep.mubr.bf16.mxu0 0
    %1210 = vmatmul.mubr.bf16.gmra.mrb[0].mxu0 %v550
    %v1211 = vpop.f32.mrb[0].mxu0
    %v1212 = vadd.f32 0.0, %v1211
    %v1213 = vpop.f32.mrb[0].mxu0
    %v1214 = vpop.f32.mrb[0].mxu0
    %v1215 = vadd.f32 0.0, %v1214
    %v1216 = vpop.f32.mrb[0].mxu0
    %1217 = vmatprep.mubr.bf16.mxu0 0
    %1218 = vmatmul.mubr.bf16.gmra.mrb[0].mxu0 %v553
    %v1219 = vpop.f32.mrb[0].mxu0
    %v1220 = vadd.f32 0.0, %v1219
    %v1221 = vpop.f32.mrb[0].mxu0
    %v1222 = vpop.f32.mrb[0].mxu0
    %v1223 = vadd.f32 0.0, %v1222
    %v1224 = vpop.f32.mrb[0].mxu0
    %1225 = vmatprep.mubr.bf16.mxu0 0
    %1226 = vmatmul.mubr.bf16.gmra.mrb[0].mxu0 %v556
    %v1227 = vpop.f32.mrb[0].mxu0
    %v1228 = vadd.f32 0.0, %v1227
    %v1229 = vpop.f32.mrb[0].mxu0
    %v1230 = vpop.f32.mrb[0].mxu0
    %v1231 = vadd.f32 0.0, %v1230
    %v1232 = vpop.f32.mrb[0].mxu0
    %1233 = vdwg.mxu0
    %1234 = vrot.lane.b32.xlu0 %v1220, 32
    %v1235 = vpop.permute.xlu0 %1234
    %1236 = vrot.lane.b32.xlu0 %v1223, 32
    %v1237 = vpop.permute.xlu0 %1236
    %1238 = vrot.lane.b32.xlu0 %v1228, 32
    %v1239 = vpop.permute.xlu0 %1238
    %1240 = vrot.lane.b32.xlu0 %v1231, 32
    %v1241 = vpop.permute.xlu0 %1240
    %v1242 = vadd.f32 %v1204, %v1235
    %v1243 = vadd.f32 %v1207, %v1237
    %v1244 = vadd.f32 %v1212, %v1239
    %v1245 = vadd.f32 %v1215, %v1241
    %v1246 = vadd.f32 %v1242, %v540
    %v1247 = vadd.f32 %v1243, %v541
    %v1248 = vadd.f32 %v1244, %v542
    %v1249 = vadd.f32 %v1245, %v543
    %s1250 = scalar_lea.vmem %s9, 64
    %v1251 = vld [vmem:[%s1250] sm:$0xf]
    %v1252 = vld [vmem:[%s1250 + $0x4] sm:$0xf]
    %v1253 = vld [vmem:[%s1250 + $0x8] sm:$0xf]
    %v1254 = vld [vmem:[%s1250 + $0xc] sm:$0xf]
    %v1255 = vld [vmem:[%s1250 + $0x10] sm:$0xf]
    %v1256 = vld [vmem:[%s1250 + $0x14] sm:$0xf]
    %v1257 = vld [vmem:[%s1250 + $0x18] sm:$0xf]
    %v1258 = vld [vmem:[%s1250 + $0x1c] sm:$0xf]
    %v1259 = vld [vmem:[%s1250 + $0x20] sm:$0xf]
    %v1260 = vld [vmem:[%s1250 + $0x24] sm:$0xf]
    %v1261 = vld [vmem:[%s1250 + $0x28] sm:$0xf]
    %v1262 = vld [vmem:[%s1250 + $0x2c] sm:$0xf]
    %v1263 = vld [vmem:[%s1250 + $0x30] sm:$0xf]
    %v1264 = vld [vmem:[%s1250 + $0x34] sm:$0xf]
    %v1265 = vld [vmem:[%s1250 + $0x38] sm:$0xf]
    %v1266 = vld [vmem:[%s1250 + $0x3c] sm:$0xf]
    %v1267 = vpack.c.bf16 %v1247, %v1246
    %v1268 = vpack.c.bf16 %v1249, %v1248
    %s1269 = scalar_lea.vmem [#allocation9], 1
    %v1270 = vld [vmem:[%s1269] sm:$0x1]
    %v1272 = vlaneseq
    %v1273 = vshrl.u32 %v1272, 7
    %v1274 = vsub.s32 0, %v1273
    %v1275 = vrot.slane %v1270, %v1274
    %v1293 = vunpack.c.l.b16 %v1251
    %v1294 = vunpack.c.l.b16 %v1252
    %v1295 = vunpack.c.l.b16 %v1253
    %v1296 = vunpack.c.l.b16 %v1254
    %v1297 = vunpack.c.l.b16 %v1255
    %v1298 = vunpack.c.l.b16 %v1256
    %v1299 = vunpack.c.l.b16 %v1257
    %v1300 = vunpack.c.l.b16 %v1258
    %v1301 = vunpack.c.l.b16 %v1259
    %v1302 = vunpack.c.l.b16 %v1260
    %v1303 = vunpack.c.l.b16 %v1261
    %v1304 = vunpack.c.l.b16 %v1262
    %v1305 = vunpack.c.l.b16 %v1263
    %v1306 = vunpack.c.l.b16 %v1264
    %v1307 = vunpack.c.l.b16 %v1265
    %v1308 = vunpack.c.l.b16 %v1266
    %v1309 = vpack.c.b16 %v1294, %v1293
    %v1310 = vpack.c.b16 %v1296, %v1295
    %v1311 = vpack.c.b16 %v1298, %v1297
    %v1312 = vpack.c.b16 %v1300, %v1299
    %v1313 = vpack.c.b16 %v1302, %v1301
    %v1314 = vpack.c.b16 %v1304, %v1303
    %v1315 = vpack.c.b16 %v1306, %v1305
    %v1316 = vpack.c.b16 %v1308, %v1307
    %1325 = vmatprep.subr.bf16.mxu0 0
    %1326 = vmatpush1.bf16.msra.mxu0 %v1309
    %1327 = vmatprep.subr.bf16.mxu0 0
    %1328 = vmatpush1.bf16.msra.mxu0 %v1310
    %1329 = vmatprep.subr.bf16.mxu0 0
    %1330 = vmatpush1.bf16.msra.mxu0 %v1311
    %1331 = vmatprep.subr.bf16.mxu0 0
    %1332 = vmatpush1.bf16.msra.mxu0 %v1312
    %1333 = vmatprep.subr.bf16.mxu0 0
    %1334 = vmatpush1.bf16.msra.mxu0 %v1313
    %1335 = vmatprep.subr.bf16.mxu0 0
    %1336 = vmatpush1.bf16.msra.mxu0 %v1314
    %1337 = vmatprep.subr.bf16.mxu0 0
    %1338 = vmatpush1.bf16.msra.mxu0 %v1315
    %1339 = vmatprep.subr.bf16.mxu0 0
    %1340 = vmatpush1.bf16.msra.mxu0 %v1316
    %1341 = vmatprep.subr.bf16.mxu0 0
    %1342 = vmatpush1.bf16.msra.mxu0 0
    %1343 = vmatprep.subr.bf16.mxu0 0
    %1344 = vmatpush1.bf16.msra.mxu0 0
    %1345 = vmatprep.subr.bf16.mxu0 0
    %1346 = vmatpush1.bf16.msra.mxu0 0
    %1347 = vmatprep.subr.bf16.mxu0 0
    %1348 = vmatpush1.bf16.msra.mxu0 0
    %1349 = vmatprep.subr.bf16.mxu0 0
    %1350 = vmatpush1.bf16.msra.mxu0 0
    %1351 = vmatprep.subr.bf16.mxu0 0
    %1352 = vmatpush1.bf16.msra.mxu0 0
    %1353 = vmatprep.subr.bf16.mxu0 0
    %1354 = vmatpush1.bf16.msra.mxu0 0
    %1355 = vmatprep.subr.bf16.mxu0 0
    %1356 = vmatpush1.bf16.msra.mxu0 0
    %1357 = vmatprep.mubr.bf16.mxu0 0
    %1358 = vmatmul.mubr.bf16.gmra.mrb[0].mxu0 %v1267
    %v1359 = vpop.f32.mrb[0].mxu0
    %v1360 = vadd.f32 %v1275, %v1359
    %v1361 = vpop.f32.mrb[0].mxu0
    %v1362 = vpop.f32.mrb[0].mxu0
    %v1363 = vadd.f32 %v1275, %v1362
    %v1364 = vpop.f32.mrb[0].mxu0
    %1365 = vmatprep.mubr.bf16.mxu0 0
    %1366 = vmatmul.mubr.bf16.gmra.mrb[0].mxu0 %v1268
    %v1367 = vpop.f32.mrb[0].mxu0
    %v1368 = vadd.f32 %v1275, %v1367
    %v1369 = vpop.f32.mrb[0].mxu0
    %v1370 = vpop.f32.mrb[0].mxu0
    %v1371 = vadd.f32 %v1275, %v1370
    %v1372 = vpop.f32.mrb[0].mxu0
    %1373 = vdwg.mxu0
    %v1374 = vmax.f32 %v1360, 0.0
    %v1375 = vmax.f32 %v1363, 0.0
    %v1376 = vmax.f32 %v1368, 0.0
    %v1377 = vmax.f32 %v1371, 0.0
    %s1378 = scalar_lea.vmem %s11, 64
    %v1379 = vld [vmem:[%s1378] sm:$0xf]
    %v1380 = vld [vmem:[%s1378 + $0x4] sm:$0xf]
    %v1381 = vld [vmem:[%s1378 + $0x8] sm:$0xf]
    %v1382 = vld [vmem:[%s1378 + $0xc] sm:$0xf]
    %v1383 = vld [vmem:[%s1378 + $0x10] sm:$0xf]
    %v1384 = vld [vmem:[%s1378 + $0x14] sm:$0xf]
    %v1385 = vld [vmem:[%s1378 + $0x18] sm:$0xf]
    %v1386 = vld [vmem:[%s1378 + $0x1c] sm:$0xf]
    %v1387 = vld [vmem:[%s1378 + $0x20] sm:$0xf]
    %v1388 = vld [vmem:[%s1378 + $0x24] sm:$0xf]
    %v1389 = vld [vmem:[%s1378 + $0x28] sm:$0xf]
    %v1390 = vld [vmem:[%s1378 + $0x2c] sm:$0xf]
    %v1391 = vld [vmem:[%s1378 + $0x30] sm:$0xf]
    %v1392 = vld [vmem:[%s1378 + $0x34] sm:$0xf]
    %v1393 = vld [vmem:[%s1378 + $0x38] sm:$0xf]
    %v1394 = vld [vmem:[%s1378 + $0x3c] sm:$0xf]
    %v1395 = vpack.c.bf16 %v1375, %v1374
    %v1396 = vpack.c.bf16 %v1377, %v1376
    %s1397 = scalar_lea.vmem [#allocation10], 1
    %v1398 = vld [vmem:[%s1397] sm:$0x1]
    %v1400 = vlaneseq
    %v1401 = vshrl.u32 %v1400, 7
    %v1402 = vsub.s32 0, %v1401
    %v1403 = vrot.slane %v1398, %v1402
    %v1421 = vunpack.c.l.b16 %v1379
    %v1422 = vunpack.c.l.b16 %v1380
    %v1423 = vunpack.c.l.b16 %v1381
    %v1424 = vunpack.c.l.b16 %v1382
    %v1425 = vunpack.c.l.b16 %v1383
    %v1426 = vunpack.c.l.b16 %v1384
    %v1427 = vunpack.c.l.b16 %v1385
    %v1428 = vunpack.c.l.b16 %v1386
    %v1429 = vunpack.c.l.b16 %v1387
    %v1430 = vunpack.c.l.b16 %v1388
    %v1431 = vunpack.c.l.b16 %v1389
    %v1432 = vunpack.c.l.b16 %v1390
    %v1433 = vunpack.c.l.b16 %v1391
    %v1434 = vunpack.c.l.b16 %v1392
    %v1435 = vunpack.c.l.b16 %v1393
    %v1436 = vunpack.c.l.b16 %v1394
    %v1437 = vpack.c.b16 %v1422, %v1421
    %v1438 = vpack.c.b16 %v1424, %v1423
    %v1439 = vpack.c.b16 %v1426, %v1425
    %v1440 = vpack.c.b16 %v1428, %v1427
    %v1441 = vpack.c.b16 %v1430, %v1429
    %v1442 = vpack.c.b16 %v1432, %v1431
    %v1443 = vpack.c.b16 %v1434, %v1433
    %v1444 = vpack.c.b16 %v1436, %v1435
    %1453 = vmatprep.subr.bf16.mxu0 0
    %1454 = vmatpush1.bf16.msra.mxu0 %v1437
    %1455 = vmatprep.subr.bf16.mxu0 0
    %1456 = vmatpush1.bf16.msra.mxu0 %v1438
    %1457 = vmatprep.subr.bf16.mxu0 0
    %1458 = vmatpush1.bf16.msra.mxu0 %v1439
    %1459 = vmatprep.subr.bf16.mxu0 0
    %1460 = vmatpush1.bf16.msra.mxu0 %v1440
    %1461 = vmatprep.subr.bf16.mxu0 0
    %1462 = vmatpush1.bf16.msra.mxu0 %v1441
    %1463 = vmatprep.subr.bf16.mxu0 0
    %1464 = vmatpush1.bf16.msra.mxu0 %v1442
    %1465 = vmatprep.subr.bf16.mxu0 0
    %1466 = vmatpush1.bf16.msra.mxu0 %v1443
    %1467 = vmatprep.subr.bf16.mxu0 0
    %1468 = vmatpush1.bf16.msra.mxu0 %v1444
    %1469 = vmatprep.subr.bf16.mxu0 0
    %1470 = vmatpush1.bf16.msra.mxu0 0
    %1471 = vmatprep.subr.bf16.mxu0 0
    %1472 = vmatpush1.bf16.msra.mxu0 0
    %1473 = vmatprep.subr.bf16.mxu0 0
    %1474 = vmatpush1.bf16.msra.mxu0 0
    %1475 = vmatprep.subr.bf16.mxu0 0
    %1476 = vmatpush1.bf16.msra.mxu0 0
    %1477 = vmatprep.subr.bf16.mxu0 0
    %1478 = vmatpush1.bf16.msra.mxu0 0
    %1479 = vmatprep.subr.bf16.mxu0 0
    %1480 = vmatpush1.bf16.msra.mxu0 0
    %1481 = vmatprep.subr.bf16.mxu0 0
    %1482 = vmatpush1.bf16.msra.mxu0 0
    %1483 = vmatprep.subr.bf16.mxu0 0
    %1484 = vmatpush1.bf16.msra.mxu0 0
    %1485 = vmatprep.mubr.bf16.mxu0 0
    %1486 = vmatmul.mubr.bf16.gmra.mrb[0].mxu0 %v1395
    %v1487 = vpop.f32.mrb[0].mxu0
    %v1488 = vadd.f32 %v1403, %v1487
    %v1489 = vpop.f32.mrb[0].mxu0
    %v1490 = vpop.f32.mrb[0].mxu0
    %v1491 = vadd.f32 %v1403, %v1490
    %v1492 = vpop.f32.mrb[0].mxu0
    %1493 = vmatprep.mubr.bf16.mxu0 0
    %1494 = vmatmul.mubr.bf16.gmra.mrb[0].mxu0 %v1396
    %v1495 = vpop.f32.mrb[0].mxu0
    %v1496 = vadd.f32 %v1403, %v1495
    %v1497 = vpop.f32.mrb[0].mxu0
    %v1498 = vpop.f32.mrb[0].mxu0
    %v1499 = vadd.f32 %v1403, %v1498
    %v1500 = vpop.f32.mrb[0].mxu0
    %1501 = vdwg.mxu0
    %v1502 = vpack.c.bf16 %v1491, %v1488
    %v1503 = vpack.c.bf16 %v1499, %v1496
    %1504 = vmatprep.subr.bf16.mxu0 0
    %1505 = vmatpush1.bf16.msra.mxu0 %v1502
    %1506 = vmatprep.subr.bf16.mxu0 0
    %1507 = vmatpush1.bf16.msra.mxu0 %v1503
    %1508 = vmatprep.subr.bf16.mxu0 0
    %1509 = vmatpush1.bf16.msra.mxu0 0
    %1510 = vmatprep.subr.bf16.mxu0 0
    %1511 = vmatpush1.bf16.msra.mxu0 0
    %1512 = vmatprep.subr.bf16.mxu0 0
    %1513 = vmatpush1.bf16.msra.mxu0 0
    %1514 = vmatprep.subr.bf16.mxu0 0
    %1515 = vmatpush1.bf16.msra.mxu0 0
    %1516 = vmatprep.subr.bf16.mxu0 0
    %1517 = vmatpush1.bf16.msra.mxu0 0
    %1518 = vmatprep.subr.bf16.mxu0 0
    %1519 = vmatpush1.bf16.msra.mxu0 0
    %1520 = vmatprep.subr.bf16.mxu0 0
    %1521 = vmatpush1.bf16.msra.mxu0 0
    %1522 = vmatprep.subr.bf16.mxu0 0
    %1523 = vmatpush1.bf16.msra.mxu0 0
    %1524 = vmatprep.subr.bf16.mxu0 0
    %1525 = vmatpush1.bf16.msra.mxu0 0
    %1526 = vmatprep.subr.bf16.mxu0 0
    %1527 = vmatpush1.bf16.msra.mxu0 0
    %1528 = vmatprep.subr.bf16.mxu0 0
    %1529 = vmatpush1.bf16.msra.mxu0 0
    %1530 = vmatprep.subr.bf16.mxu0 0
    %1531 = vmatpush1.bf16.msra.mxu0 0
    %1532 = vmatprep.subr.bf16.mxu0 0
    %1533 = vmatpush1.bf16.msra.mxu0 0
    %1534 = vmatprep.subr.bf16.mxu0 0
    %1535 = vmatpush1.bf16.msra.mxu0 0
    %1536 = vmatprep.mubr.bf16.mxu0 0
    %1537 = vmatmul.mubr.bf16.gmra.mrb[0].mxu0 %v891
    %v1538 = vpop.f32.mrb[0].mxu0
    %v1539 = vadd.f32 0.0, %v1538
    %v1540 = vpop.f32.mrb[0].mxu0
    %v1541 = vpop.f32.mrb[0].mxu0
    %v1542 = vadd.f32 0.0, %v1541
    %v1543 = vpop.f32.mrb[0].mxu0
    %1544 = vdwg.mxu0
    %1545 = vrot.lane.b32.xlu0 %v1539, 32
    %v1546 = vpop.permute.xlu0 %1545
    %1547 = vrot.lane.b32.xlu0 %v1542, 32
    %v1548 = vpop.permute.xlu0 %1547
    %v1549 = vadd.f32 %v1162, %v1546
    %v1550 = vadd.f32 %v1165, %v1548
    %s1551 = scalar_lea.vmem %s13, 64
    %v1552 = vld [vmem:[%s1551] sm:$0xf]
    %v1553 = vld [vmem:[%s1551 + $0x4] sm:$0xf]
    %v1554 = vld [vmem:[%s1551 + $0x8] sm:$0xf]
    %v1555 = vld [vmem:[%s1551 + $0xc] sm:$0xf]
    %v1556 = vld [vmem:[%s1551 + $0x10] sm:$0xf]
    %v1557 = vld [vmem:[%s1551 + $0x14] sm:$0xf]
    %v1558 = vld [vmem:[%s1551 + $0x18] sm:$0xf]
    %v1559 = vld [vmem:[%s1551 + $0x1c] sm:$0xf]
    %v1560 = vld [vmem:[%s1551 + $0x20] sm:$0xf]
    %v1561 = vld [vmem:[%s1551 + $0x24] sm:$0xf]
    %v1562 = vld [vmem:[%s1551 + $0x28] sm:$0xf]
    %v1563 = vld [vmem:[%s1551 + $0x2c] sm:$0xf]
    %v1564 = vld [vmem:[%s1551 + $0x30] sm:$0xf]
    %v1565 = vld [vmem:[%s1551 + $0x34] sm:$0xf]
    %v1566 = vld [vmem:[%s1551 + $0x38] sm:$0xf]
    %v1567 = vld [vmem:[%s1551 + $0x3c] sm:$0xf]
    %v1568 = vpack.c.bf16 %v1550, %v1549
    %s1569 = scalar_lea.vmem [#allocation12], 1
    %v1570 = vld [vmem:[%s1569] sm:$0x1]
    %v1572 = vlaneseq
    %v1573 = vshrl.u32 %v1572, 7
    %v1574 = vsub.s32 0, %v1573
    %v1575 = vrot.slane %v1570, %v1574
    %v1593 = vunpack.c.l.b16 %v1552
    %v1594 = vunpack.c.l.b16 %v1553
    %v1595 = vunpack.c.l.b16 %v1554
    %v1596 = vunpack.c.l.b16 %v1555
    %v1597 = vunpack.c.l.b16 %v1556
    %v1598 = vunpack.c.l.b16 %v1557
    %v1599 = vunpack.c.l.b16 %v1558
    %v1600 = vunpack.c.l.b16 %v1559
    %v1601 = vunpack.c.l.b16 %v1560
    %v1602 = vunpack.c.l.b16 %v1561
    %v1603 = vunpack.c.l.b16 %v1562
    %v1604 = vunpack.c.l.b16 %v1563
    %v1605 = vunpack.c.l.b16 %v1564
    %v1606 = vunpack.c.l.b16 %v1565
    %v1607 = vunpack.c.l.b16 %v1566
    %v1608 = vunpack.c.l.b16 %v1567
    %v1609 = vpack.c.b16 %v1594, %v1593
    %v1610 = vpack.c.b16 %v1596, %v1595
    %v1611 = vpack.c.b16 %v1598, %v1597
    %v1612 = vpack.c.b16 %v1600, %v1599
    %v1613 = vpack.c.b16 %v1602, %v1601
    %v1614 = vpack.c.b16 %v1604, %v1603
    %v1615 = vpack.c.b16 %v1606, %v1605
    %v1616 = vpack.c.b16 %v1608, %v1607
    %1625 = vmatprep.subr.bf16.mxu0 0
    %1626 = vmatpush1.bf16.msra.mxu0 %v1609
    %1627 = vmatprep.subr.bf16.mxu0 0
    %1628 = vmatpush1.bf16.msra.mxu0 %v1610
    %1629 = vmatprep.subr.bf16.mxu0 0
    %1630 = vmatpush1.bf16.msra.mxu0 %v1611
    %1631 = vmatprep.subr.bf16.mxu0 0
    %1632 = vmatpush1.bf16.msra.mxu0 %v1612
    %1633 = vmatprep.subr.bf16.mxu0 0
    %1634 = vmatpush1.bf16.msra.mxu0 %v1613
    %1635 = vmatprep.subr.bf16.mxu0 0
    %1636 = vmatpush1.bf16.msra.mxu0 %v1614
    %1637 = vmatprep.subr.bf16.mxu0 0
    %1638 = vmatpush1.bf16.msra.mxu0 %v1615
    %1639 = vmatprep.subr.bf16.mxu0 0
    %1640 = vmatpush1.bf16.msra.mxu0 %v1616
    %1641 = vmatprep.subr.bf16.mxu0 0
    %1642 = vmatpush1.bf16.msra.mxu0 0
    %1643 = vmatprep.subr.bf16.mxu0 0
    %1644 = vmatpush1.bf16.msra.mxu0 0
    %1645 = vmatprep.subr.bf16.mxu0 0
    %1646 = vmatpush1.bf16.msra.mxu0 0
    %1647 = vmatprep.subr.bf16.mxu0 0
    %1648 = vmatpush1.bf16.msra.mxu0 0
    %1649 = vmatprep.subr.bf16.mxu0 0
    %1650 = vmatpush1.bf16.msra.mxu0 0
    %1651 = vmatprep.subr.bf16.mxu0 0
    %1652 = vmatpush1.bf16.msra.mxu0 0
    %1653 = vmatprep.subr.bf16.mxu0 0
    %1654 = vmatpush1.bf16.msra.mxu0 0
    %1655 = vmatprep.subr.bf16.mxu0 0
    %1656 = vmatpush1.bf16.msra.mxu0 0
    %1657 = vmatprep.mubr.bf16.mxu0 0
    %1658 = vmatmul.mubr.bf16.gmra.mrb[0].mxu0 %v1568
    %v1659 = vpop.f32.mrb[0].mxu0
    %v1660 = vadd.f32 %v1575, %v1659
    %v1661 = vpop.f32.mrb[0].mxu0
    %v1662 = vpop.f32.mrb[0].mxu0
    %v1663 = vadd.f32 %v1575, %v1662
    %v1664 = vpop.f32.mrb[0].mxu0
    %1665 = vdwg.mxu0
    %v1666 = vmax.f32 %v1660, 0.0
    %v1667 = vmax.f32 %v1663, 0.0
    %s1668 = scalar_lea.vmem [#allocation13], 64
    %v1669 = vld [vmem:[%s1668] sm:$0xf]
    %v1670 = vld [vmem:[%s1668 + $0x4] sm:$0xf]
    %v1671 = vld [vmem:[%s1668 + $0x8] sm:$0xf]
    %v1672 = vld [vmem:[%s1668 + $0xc] sm:$0xf]
    %v1673 = vld [vmem:[%s1668 + $0x10] sm:$0xf]
    %v1674 = vld [vmem:[%s1668 + $0x14] sm:$0xf]
    %v1675 = vld [vmem:[%s1668 + $0x18] sm:$0xf]
    %v1676 = vld [vmem:[%s1668 + $0x1c] sm:$0xf]
    %v1677 = vld [vmem:[%s1668 + $0x20] sm:$0xf]
    %v1678 = vld [vmem:[%s1668 + $0x24] sm:$0xf]
    %v1679 = vld [vmem:[%s1668 + $0x28] sm:$0xf]
    %v1680 = vld [vmem:[%s1668 + $0x2c] sm:$0xf]
    %v1681 = vld [vmem:[%s1668 + $0x30] sm:$0xf]
    %v1682 = vld [vmem:[%s1668 + $0x34] sm:$0xf]
    %v1683 = vld [vmem:[%s1668 + $0x38] sm:$0xf]
    %v1684 = vld [vmem:[%s1668 + $0x3c] sm:$0xf]
    %v1685 = vpack.c.bf16 %v1667, %v1666
    %s1686 = scalar_lea.vmem %s16, 1
    %v1687 = vld [vmem:[%s1686] sm:$0x1]
    %v1689 = vlaneseq
    %v1690 = vshrl.u32 %v1689, 7
    %v1691 = vsub.s32 0, %v1690
    %v1692 = vrot.slane %v1687, %v1691
    %v1710 = vunpack.c.l.b16 %v1669
    %v1711 = vunpack.c.l.b16 %v1670
    %v1712 = vunpack.c.l.b16 %v1671
    %v1713 = vunpack.c.l.b16 %v1672
    %v1714 = vunpack.c.l.b16 %v1673
    %v1715 = vunpack.c.l.b16 %v1674
    %v1716 = vunpack.c.l.b16 %v1675
    %v1717 = vunpack.c.l.b16 %v1676
    %v1718 = vunpack.c.l.b16 %v1677
    %v1719 = vunpack.c.l.b16 %v1678
    %v1720 = vunpack.c.l.b16 %v1679
    %v1721 = vunpack.c.l.b16 %v1680
    %v1722 = vunpack.c.l.b16 %v1681
    %v1723 = vunpack.c.l.b16 %v1682
    %v1724 = vunpack.c.l.b16 %v1683
    %v1725 = vunpack.c.l.b16 %v1684
    %v1726 = vpack.c.b16 %v1711, %v1710
    %v1727 = vpack.c.b16 %v1713, %v1712
    %v1728 = vpack.c.b16 %v1715, %v1714
    %v1729 = vpack.c.b16 %v1717, %v1716
    %v1730 = vpack.c.b16 %v1719, %v1718
    %v1731 = vpack.c.b16 %v1721, %v1720
    %v1732 = vpack.c.b16 %v1723, %v1722
    %v1733 = vpack.c.b16 %v1725, %v1724
    %1742 = vmatprep.subr.bf16.mxu0 0
    %1743 = vmatpush1.bf16.msra.mxu0 %v1726
    %1744 = vmatprep.subr.bf16.mxu0 0
    %1745 = vmatpush1.bf16.msra.mxu0 %v1727
    %1746 = vmatprep.subr.bf16.mxu0 0
    %1747 = vmatpush1.bf16.msra.mxu0 %v1728
    %1748 = vmatprep.subr.bf16.mxu0 0
    %1749 = vmatpush1.bf16.msra.mxu0 %v1729
    %1750 = vmatprep.subr.bf16.mxu0 0
    %1751 = vmatpush1.bf16.msra.mxu0 %v1730
    %1752 = vmatprep.subr.bf16.mxu0 0
    %1753 = vmatpush1.bf16.msra.mxu0 %v1731
    %1754 = vmatprep.subr.bf16.mxu0 0
    %1755 = vmatpush1.bf16.msra.mxu0 %v1732
    %1756 = vmatprep.subr.bf16.mxu0 0
    %1757 = vmatpush1.bf16.msra.mxu0 %v1733
    %1758 = vmatprep.subr.bf16.mxu0 0
    %1759 = vmatpush1.bf16.msra.mxu0 0
    %1760 = vmatprep.subr.bf16.mxu0 0
    %1761 = vmatpush1.bf16.msra.mxu0 0
    %1762 = vmatprep.subr.bf16.mxu0 0
    %1763 = vmatpush1.bf16.msra.mxu0 0
    %1764 = vmatprep.subr.bf16.mxu0 0
    %1765 = vmatpush1.bf16.msra.mxu0 0
    %1766 = vmatprep.subr.bf16.mxu0 0
    %1767 = vmatpush1.bf16.msra.mxu0 0
    %1768 = vmatprep.subr.bf16.mxu0 0
    %1769 = vmatpush1.bf16.msra.mxu0 0
    %1770 = vmatprep.subr.bf16.mxu0 0
    %1771 = vmatpush1.bf16.msra.mxu0 0
    %1772 = vmatprep.subr.bf16.mxu0 0
    %1773 = vmatpush1.bf16.msra.mxu0 0
    %1774 = vmatprep.mubr.bf16.mxu0 0
    %1775 = vmatmul.mubr.bf16.gmra.mrb[0].mxu0 %v1685
    %v1776 = vpop.f32.mrb[0].mxu0
    %v1777 = vadd.f32 %v1692, %v1776
    %v1778 = vpop.f32.mrb[0].mxu0
    %v1779 = vpop.f32.mrb[0].mxu0
    %v1780 = vadd.f32 %v1692, %v1779
    %v1781 = vpop.f32.mrb[0].mxu0
    %1782 = vdwg.mxu0
    %v1783 = vpack.c.bf16 %v1780, %v1777
    %v1785 = vsel %vm545, %v309, 0
    %1787 = vmatprep.subr.bf16.mxu0 0
    %1788 = vmatpush1.bf16.msra.mxu0 %v1783
    %1789 = vmatprep.subr.bf16.mxu0 0
    %1790 = vmatpush1.bf16.msra.mxu0 0
    %1791 = vmatprep.subr.bf16.mxu0 0
    %1792 = vmatpush1.bf16.msra.mxu0 0
    %1793 = vmatprep.subr.bf16.mxu0 0
    %1794 = vmatpush1.bf16.msra.mxu0 0
    %1795 = vmatprep.subr.bf16.mxu0 0
    %1796 = vmatpush1.bf16.msra.mxu0 0
    %1797 = vmatprep.subr.bf16.mxu0 0
    %1798 = vmatpush1.bf16.msra.mxu0 0
    %1799 = vmatprep.subr.bf16.mxu0 0
    %1800 = vmatpush1.bf16.msra.mxu0 0
    %1801 = vmatprep.subr.bf16.mxu0 0
    %1802 = vmatpush1.bf16.msra.mxu0 0
    %1803 = vmatprep.subr.bf16.mxu0 0
    %1804 = vmatpush1.bf16.msra.mxu0 0
    %1805 = vmatprep.subr.bf16.mxu0 0
    %1806 = vmatpush1.bf16.msra.mxu0 0
    %1807 = vmatprep.subr.bf16.mxu0 0
    %1808 = vmatpush1.bf16.msra.mxu0 0
    %1809 = vmatprep.subr.bf16.mxu0 0
    %1810 = vmatpush1.bf16.msra.mxu0 0
    %1811 = vmatprep.subr.bf16.mxu0 0
    %1812 = vmatpush1.bf16.msra.mxu0 0
    %1813 = vmatprep.subr.bf16.mxu0 0
    %1814 = vmatpush1.bf16.msra.mxu0 0
    %1815 = vmatprep.subr.bf16.mxu0 0
    %1816 = vmatpush1.bf16.msra.mxu0 0
    %1817 = vmatprep.subr.bf16.mxu0 0
    %1818 = vmatpush1.bf16.msra.mxu0 0
    %1819 = vmatprep.mubr.bf16.mxu0 0
    %1820 = vmatmul.mubr.bf16.gmra.mrb[0].mxu0 %v1785
    %v1821 = vpop.f32.mrb[0].mxu0
    %v1822 = vadd.f32 0.0, %v1821
    %v1823 = vpop.f32.mrb[0].mxu0
    %v1824 = vpop.f32.mrb[0].mxu0
    %v1825 = vpop.f32.mrb[0].mxu0
    %1826 = vdwg.mxu0
    %v1827 = vld [vmem:[#allocation15] sm:$0xf]
    %v1828 = vld [vmem:[#allocation15 + $0x4] sm:$0xf]
    %v1829 = vld [vmem:[#allocation15 + $0x8] sm:$0xf]
    %v1830 = vld [vmem:[#allocation15 + $0xc] sm:$0xf]
    %v1831 = vld [vmem:[#allocation15 + $0x10] sm:$0xf]
    %v1832 = vld [vmem:[#allocation15 + $0x14] sm:$0xf]
    %v1833 = vld [vmem:[#allocation15 + $0x18] sm:$0xf]
    %v1834 = vld [vmem:[#allocation15 + $0x1c] sm:$0xf]
    %v1835 = vld [vmem:[#allocation15 + $0x20] sm:$0xf]
    %v1836 = vld [vmem:[#allocation15 + $0x24] sm:$0xf]
    %v1837 = vld [vmem:[#allocation15 + $0x28] sm:$0xf]
    %v1838 = vld [vmem:[#allocation15 + $0x2c] sm:$0xf]
    %v1839 = vld [vmem:[#allocation15 + $0x30] sm:$0xf]
    %v1840 = vld [vmem:[#allocation15 + $0x34] sm:$0xf]
    %v1841 = vld [vmem:[#allocation15 + $0x38] sm:$0xf]
    %v1842 = vld [vmem:[#allocation15 + $0x3c] sm:$0xf]
    %v1843 = vpack.c.bf16 %v1822, %v1822
    %v1844 = vld [vmem:[#allocation16] sm:$0x1]
    %v1846 = vlaneseq
    %v1847 = vshrl.u32 %v1846, 7
    %v1848 = vsub.s32 0, %v1847
    %v1849 = vrot.slane %v1844, %v1848
    %v1867 = vunpack.c.l.b16 %v1827
    %v1868 = vunpack.c.l.b16 %v1828
    %v1869 = vunpack.c.l.b16 %v1829
    %v1870 = vunpack.c.l.b16 %v1830
    %v1871 = vunpack.c.l.b16 %v1831
    %v1872 = vunpack.c.l.b16 %v1832
    %v1873 = vunpack.c.l.b16 %v1833
    %v1874 = vunpack.c.l.b16 %v1834
    %v1875 = vunpack.c.l.b16 %v1835
    %v1876 = vunpack.c.l.b16 %v1836
    %v1877 = vunpack.c.l.b16 %v1837
    %v1878 = vunpack.c.l.b16 %v1838
    %v1879 = vunpack.c.l.b16 %v1839
    %v1880 = vunpack.c.l.b16 %v1840
    %v1881 = vunpack.c.l.b16 %v1841
    %v1882 = vunpack.c.l.b16 %v1842
    %v1883 = vpack.c.b16 %v1868, %v1867
    %v1884 = vpack.c.b16 %v1870, %v1869
    %v1885 = vpack.c.b16 %v1872, %v1871
    %v1886 = vpack.c.b16 %v1874, %v1873
    %v1887 = vpack.c.b16 %v1876, %v1875
    %v1888 = vpack.c.b16 %v1878, %v1877
    %v1889 = vpack.c.b16 %v1880, %v1879
    %v1890 = vpack.c.b16 %v1882, %v1881
    %1899 = vmatprep.subr.bf16.mxu0 0
    %1900 = vmatpush1.bf16.msra.mxu0 %v1883
    %1901 = vmatprep.subr.bf16.mxu0 0
    %1902 = vmatpush1.bf16.msra.mxu0 %v1884
    %1903 = vmatprep.subr.bf16.mxu0 0
    %1904 = vmatpush1.bf16.msra.mxu0 %v1885
    %1905 = vmatprep.subr.bf16.mxu0 0
    %1906 = vmatpush1.bf16.msra.mxu0 %v1886
    %1907 = vmatprep.subr.bf16.mxu0 0
    %1908 = vmatpush1.bf16.msra.mxu0 %v1887
    %1909 = vmatprep.subr.bf16.mxu0 0
    %1910 = vmatpush1.bf16.msra.mxu0 %v1888
    %1911 = vmatprep.subr.bf16.mxu0 0
    %1912 = vmatpush1.bf16.msra.mxu0 %v1889
    %1913 = vmatprep.subr.bf16.mxu0 0
    %1914 = vmatpush1.bf16.msra.mxu0 %v1890
    %1915 = vmatprep.subr.bf16.mxu0 0
    %1916 = vmatpush1.bf16.msra.mxu0 0
    %1917 = vmatprep.subr.bf16.mxu0 0
    %1918 = vmatpush1.bf16.msra.mxu0 0
    %1919 = vmatprep.subr.bf16.mxu0 0
    %1920 = vmatpush1.bf16.msra.mxu0 0
    %1921 = vmatprep.subr.bf16.mxu0 0
    %1922 = vmatpush1.bf16.msra.mxu0 0
    %1923 = vmatprep.subr.bf16.mxu0 0
    %1924 = vmatpush1.bf16.msra.mxu0 0
    %1925 = vmatprep.subr.bf16.mxu0 0
    %1926 = vmatpush1.bf16.msra.mxu0 0
    %1927 = vmatprep.subr.bf16.mxu0 0
    %1928 = vmatpush1.bf16.msra.mxu0 0
    %1929 = vmatprep.subr.bf16.mxu0 0
    %1930 = vmatpush1.bf16.msra.mxu0 0
    %1931 = vmatprep.mubr.bf16.mxu0 0
    %1932 = vmatmul.mubr.bf16.gmra.mrb[0].mxu0 %v1843
    %v1933 = vpop.f32.mrb[0].mxu0
    %v1934 = vadd.f32 %v1849, %v1933
    %v1935 = vpop.f32.mrb[0].mxu0
    %v1936 = vpop.f32.mrb[0].mxu0
    %v1937 = vpop.f32.mrb[0].mxu0
    %1938 = vdwg.mxu0
    %v1939 = vmax.f32 %v1934, 0.0
    %v1940 = vld [vmem:[#allocation18] sm:$0xf]
    %v1941 = vld [vmem:[#allocation18 + $0x4] sm:$0xf]
    %v1942 = vld [vmem:[#allocation18 + $0x8] sm:$0xf]
    %v1943 = vld [vmem:[#allocation18 + $0xc] sm:$0xf]
    %v1944 = vld [vmem:[#allocation18 + $0x10] sm:$0xf]
    %v1945 = vld [vmem:[#allocation18 + $0x14] sm:$0xf]
    %v1946 = vld [vmem:[#allocation18 + $0x18] sm:$0xf]
    %v1947 = vld [vmem:[#allocation18 + $0x1c] sm:$0xf]
    %v1948 = vld [vmem:[#allocation18 + $0x20] sm:$0xf]
    %v1949 = vld [vmem:[#allocation18 + $0x24] sm:$0xf]
    %v1950 = vld [vmem:[#allocation18 + $0x28] sm:$0xf]
    %v1951 = vld [vmem:[#allocation18 + $0x2c] sm:$0xf]
    %v1952 = vld [vmem:[#allocation18 + $0x30] sm:$0xf]
    %v1953 = vld [vmem:[#allocation18 + $0x34] sm:$0xf]
    %v1954 = vld [vmem:[#allocation18 + $0x38] sm:$0xf]
    %v1955 = vld [vmem:[#allocation18 + $0x3c] sm:$0xf]
    %v1956 = vpack.c.bf16 %v1939, %v1939
    %v1957 = vld [vmem:[#allocation19] sm:$0x1]
    %v1959 = vlaneseq
    %v1960 = vshrl.u32 %v1959, 7
    %v1961 = vsub.s32 0, %v1960
    %v1962 = vrot.slane %v1957, %v1961
    %v1980 = vunpack.c.l.b16 %v1940
    %v1981 = vunpack.c.l.b16 %v1941
    %v1982 = vunpack.c.l.b16 %v1942
    %v1983 = vunpack.c.l.b16 %v1943
    %v1984 = vunpack.c.l.b16 %v1944
    %v1985 = vunpack.c.l.b16 %v1945
    %v1986 = vunpack.c.l.b16 %v1946
    %v1987 = vunpack.c.l.b16 %v1947
    %v1988 = vunpack.c.l.b16 %v1948
    %v1989 = vunpack.c.l.b16 %v1949
    %v1990 = vunpack.c.l.b16 %v1950
    %v1991 = vunpack.c.l.b16 %v1951
    %v1992 = vunpack.c.l.b16 %v1952
    %v1993 = vunpack.c.l.b16 %v1953
    %v1994 = vunpack.c.l.b16 %v1954
    %v1995 = vunpack.c.l.b16 %v1955
    %v1996 = vpack.c.b16 %v1981, %v1980
    %v1997 = vpack.c.b16 %v1983, %v1982
    %v1998 = vpack.c.b16 %v1985, %v1984
    %v1999 = vpack.c.b16 %v1987, %v1986
    %v2000 = vpack.c.b16 %v1989, %v1988
    %v2001 = vpack.c.b16 %v1991, %v1990
    %v2002 = vpack.c.b16 %v1993, %v1992
    %v2003 = vpack.c.b16 %v1995, %v1994
    %2012 = vmatprep.subr.bf16.mxu0 0
    %2013 = vmatpush1.bf16.msra.mxu0 %v1996
    %2014 = vmatprep.subr.bf16.mxu0 0
    %2015 = vmatpush1.bf16.msra.mxu0 %v1997
    %2016 = vmatprep.subr.bf16.mxu0 0
    %2017 = vmatpush1.bf16.msra.mxu0 %v1998
    %2018 = vmatprep.subr.bf16.mxu0 0
    %2019 = vmatpush1.bf16.msra.mxu0 %v1999
    %2020 = vmatprep.subr.bf16.mxu0 0
    %2021 = vmatpush1.bf16.msra.mxu0 %v2000
    %2022 = vmatprep.subr.bf16.mxu0 0
    %2023 = vmatpush1.bf16.msra.mxu0 %v2001
    %2024 = vmatprep.subr.bf16.mxu0 0
    %2025 = vmatpush1.bf16.msra.mxu0 %v2002
    %2026 = vmatprep.subr.bf16.mxu0 0
    %2027 = vmatpush1.bf16.msra.mxu0 %v2003
    %2028 = vmatprep.subr.bf16.mxu0 0
    %2029 = vmatpush1.bf16.msra.mxu0 0
    %2030 = vmatprep.subr.bf16.mxu0 0
    %2031 = vmatpush1.bf16.msra.mxu0 0
    %2032 = vmatprep.subr.bf16.mxu0 0
    %2033 = vmatpush1.bf16.msra.mxu0 0
    %2034 = vmatprep.subr.bf16.mxu0 0
    %2035 = vmatpush1.bf16.msra.mxu0 0
    %2036 = vmatprep.subr.bf16.mxu0 0
    %2037 = vmatpush1.bf16.msra.mxu0 0
    %2038 = vmatprep.subr.bf16.mxu0 0
    %2039 = vmatpush1.bf16.msra.mxu0 0
    %2040 = vmatprep.subr.bf16.mxu0 0
    %2041 = vmatpush1.bf16.msra.mxu0 0
    %2042 = vmatprep.subr.bf16.mxu0 0
    %2043 = vmatpush1.bf16.msra.mxu0 0
    %2044 = vmatprep.mubr.bf16.mxu0 0
    %2045 = vmatmul.mubr.bf16.gmra.mrb[0].mxu0 %v1956
    %v2046 = vpop.f32.mrb[0].mxu0
    %v2047 = vadd.f32 %v1962, %v2046
    %v2048 = vpop.f32.mrb[0].mxu0
    %v2049 = vpop.f32.mrb[0].mxu0
    %v2050 = vpop.f32.mrb[0].mxu0
    %2051 = vdwg.mxu0
    %2052 = vst [vmem:[%s21] sm:$0xff] %v2047
    // Predicated region
    $region134: #{mpnn_forward.1} parent=1 // pred_check
      _
    $region135: #{mpnn_forward.1} parent=1 // pred_check_branch
      %2054 = sbr.rel (0) target = $region137
    $region136: #{mpnn_forward.1} parent=1 // pred_region
      _
    $region137: #{mpnn_forward.1} parent=1 // pred_fallthru
      _
    // Predicated region
    $region138: #{mpnn_forward.1} parent=1 // pred_check
      _
    $region139: #{mpnn_forward.1} parent=1 // pred_check_branch
      %2056 = sbr.rel (0) target = $region141
    $region140: #{mpnn_forward.1} parent=1 // pred_region
      _
    $region141: #{mpnn_forward.1} parent=1 // pred_fallthru
      _
    %2057 = vsyncpa [#allocation3], 1
    %2058 = vsyncpa [#allocation5], 1
    %2059 = vsyncpa [#allocation8], 1
    %2060 = vsyncpa [#allocation11], 1
    %2061 = vsyncpa [#allocation14], 1
    %2062 = vsyncpa [#allocation17], 1
    %2063 = vsyncpa [#allocation20], 1

</llo_original>
